<compile_context>
chip_gen: v5e
topology: v5e:2x2
jax: 0.10.0
libtpu: 0.0.40
codegen_flags: <defaults>
</compile_context>

<pallas_src>
import math
import numpy as np
import jax
import jax.numpy as jnp
from jax.experimental import pallas as pl
from jax.experimental.pallas import tpu as pltpu

FEATS = 8          # d_model == nhead  -> head_dim = 1
N_WINDOW = 10      # n_window (sequence length)
DFF = 16           # dim_feedforward
BATCH = 8          # demo batch
BATCH_GROUPS = 1   # grid steps: 1 on single-TC v5e/v6e; set 2 on v7x (one batch group per TC)

BT = BATCH // BATCH_GROUPS       # batch rows handled per grid step
BTE = BT * FEATS                 # lane width of activations inside the kernel (64)
BTF = BT * DFF                   # lane width of the FFN hidden activations (128)

MHA_NAMES = ("enc_sa", "dec_sa", "dec_ca")
FFN_NAMES = ("enc_ff", "dec_ff")

# ------------------------------------------------------------------------------------------
# Parameter slab layout: every batch-expanded parameter packed into ONE f32 buffer with row
# offsets aligned to the f32 sublane tile (8).  Linear weights are stored pre-transposed
# (in, out) and expanded to batch-block-diagonal kron(I_BT, W); q/k/v are fused column-wise.
# ------------------------------------------------------------------------------------------
def _align8(n):
    return (n + 7) & ~7


_EXPANDED_DEFS = [("pe", (N_WINDOW, BTE))]
for _p in MHA_NAMES:
    _EXPANDED_DEFS += [(_p + "_wqkv", (BTE, 3 * BTE)), (_p + "_bqkv", (1, 3 * BTE)),
                       (_p + "_wo",   (BTE, BTE)),     (_p + "_bo",   (1, BTE))]
for _p in FFN_NAMES:
    _EXPANDED_DEFS += [(_p + "_w1", (BTE, BTF)), (_p + "_b1", (1, BTF)),
                       (_p + "_w2", (BTF, BTE)), (_p + "_b2", (1, BTE))]

OFFSETS = {}
_row = 0
for _name, (_r, _c) in _EXPANDED_DEFS:
    OFFSETS[_name] = (_row, _r, _c)
    _row = _align8(_row + _r)          # next parameter starts on an 8-row boundary
SLAB_ROWS = _align8(_row)              # 864 for BT=8
SLAB_COLS = 3 * BTE                    # 192 for BT=8 (widest packed block)


def positional_encoding(max_len, d_model):
    # TranAD's PositionalEncoding: pe = sin(pos*div) + cos(pos*div), full-range div_term.
    pos = np.arange(max_len, dtype=np.float32)[:, None]
    div = np.exp(np.arange(d_model, dtype=np.float32) * (-math.log(10000.0) / d_model))
    return (np.sin(pos * div) + np.cos(pos * div)).astype(np.float32)


def make_params(key):
    """Small (un-expanded) parameters in PyTorch-equivalent shapes (weights pre-transposed)."""
    E = FEATS
    defs = []
    for p in MHA_NAMES:
        defs += [(p + "_wq", (E, E)), (p + "_wk", (E, E)), (p + "_wv", (E, E)),
                 (p + "_bq", (1, E)), (p + "_bk", (1, E)), (p + "_bv", (1, E)),
                 (p + "_wo", (E, E)), (p + "_bo", (1, E))]
    for p in FFN_NAMES:
        defs += [(p + "_w1", (E, DFF)), (p + "_b1", (1, DFF)),
                 (p + "_w2", (DFF, E)), (p + "_b2", (1, E))]
    shapes = dict(defs)
    names = [n for n, _ in defs]
    keys = jax.random.split(key, len(names))
    params = {"pe": jnp.asarray(positional_encoding(N_WINDOW, E))}
    for n, k in zip(names, keys):
        params[n] = (0.2 * jax.random.normal(k, shapes[n])).astype(jnp.float32)
    return params


def pack_params(params):
    """Expand to the batch-block-diagonal / fused-QKV layout and pack into the single slab."""
    slab = np.zeros((SLAB_ROWS, SLAB_COLS), np.float32)

    def put(name, arr):
        r0, nr, nc = OFFSETS[name]
        arr = np.asarray(arr, np.float32)
        assert arr.shape == (nr, nc), (name, arr.shape, (nr, nc))
        slab[r0:r0 + nr, :nc] = arr

    eye = np.eye(BT, dtype=np.float32)
    bd = lambda w: np.kron(eye, np.asarray(w, np.float32))       # (in,out) -> (BT*in, BT*out)
    tb = lambda b: np.tile(np.asarray(b, np.float32), (1, BT))   # (1,out)  -> (1, BT*out)

    put("pe", np.tile(np.asarray(params["pe"], np.float32), (1, BT)))
    for p in MHA_NAMES:
        put(p + "_wqkv", np.concatenate([bd(params[p + "_wq"]),
                                         bd(params[p + "_wk"]),
                                         bd(params[p + "_wv"])], axis=1))
        put(p + "_bqkv", np.concatenate([tb(params[p + "_bq"]),
                                         tb(params[p + "_bk"]),
                                         tb(params[p + "_bv"])], axis=1))
        put(p + "_wo", bd(params[p + "_wo"]))
        put(p + "_bo", tb(params[p + "_bo"]))
    for p in FFN_NAMES:
        put(p + "_w1", bd(params[p + "_w1"]))
        put(p + "_b1", tb(params[p + "_b1"]))
        put(p + "_w2", bd(params[p + "_w2"]))
        put(p + "_b2", tb(params[p + "_b2"]))
    return jnp.asarray(slab)


# ------------------------------------------------------------------------------------------
# Pallas kernel: one grid step processes one batch group in a (L, BT*E) layout; the whole
# parameter slab has a constant block index so it is fetched once and stays VMEM-resident.
# ------------------------------------------------------------------------------------------
def tranad_kernel(src_ref, tgt_ref, slab_ref, out_ref):
    # src_ref / tgt_ref / out_ref: (N_WINDOW, BT*FEATS)    slab_ref: (SLAB_ROWS, SLAB_COLS)
    def getp(name):
        r0, nr, nc = OFFSETS[name]
        return slab_ref[r0:r0 + nr, 0:nc]            # static, 8-aligned slice -> cheap load

    def linear(x, wname, bname):                     # one 2-D MXU matmul, no reshapes
        return jnp.dot(x, getp(wname), preferred_element_type=jnp.float32) + getp(bname)

    def qkv(x, p):                                   # fused projection: columns [q | k | v]
        return linear(x, p + "_wqkv", p + "_bqkv")

    def attend(q, k, v, p):
        # nn.MultiheadAttention(embed_dim=E, num_heads=E): head_dim == 1 -> scores are per-lane
        # outer products over the sequence; softmax scale == 1.
        s = q[:, None, :] * k[None, :, :]            # (Lq, Lk, BT*E)
        s = s - jnp.max(s, axis=1, keepdims=True)
        w = jnp.exp(s)
        attn = w / jnp.sum(w, axis=1, keepdims=True)                 # softmax over keys
        ctx = jnp.sum(attn * v[None, :, :], axis=1)                  # (Lq, BT*E)
        return linear(ctx, p + "_wo", p + "_bo")

    def mha_self(x, p):
        f = qkv(x, p)
        return attend(f[:, 0:BTE], f[:, BTE:2 * BTE], f[:, 2 * BTE:3 * BTE], p)

    def mha_cross(xq, xkv, p):
        fq, fkv = qkv(xq, p), qkv(xkv, p)
        return attend(fq[:, 0:BTE], fkv[:, BTE:2 * BTE], fkv[:, 2 * BTE:3 * BTE], p)

    def ffn(x, p):                                   # LeakyReLU(True): slope == 1 -> identity
        return linear(linear(x, p + "_w1", p + "_b1"), p + "_w2", p + "_b2")

    # src = src * sqrt(n_feats); src = pos_encoder(src)       (pe stored pre-tiled (L, BT*E))
    x = src_ref[...] * math.sqrt(FEATS) + getp("pe")

    # --- encoder layer (post-residual, no LayerNorm) ---
    x = x + mha_self(x, "enc_sa")
    x = x + ffn(x, "enc_ff")
    memory = x

    # --- decoder layer ---
    y = tgt_ref[...]
    y = y + mha_self(y, "dec_sa")
    y = y + mha_cross(y, memory, "dec_ca")
    y = y + ffn(y, "dec_ff")

    # fcn = nn.Sigmoid()   (exact; approx reciprocal dropped per correctness feedback)
    out_ref[...] = 1.0 / (1.0 + jnp.exp(-y))


# ------------------------------------------------------------------------------------------
# Wrapper: seq-first (L, B, E) in/out like the PyTorch module.  With BATCH_GROUPS == 1 the
# layout change is a free contiguous reshape (no transposes in the framing path).
# ------------------------------------------------------------------------------------------
def _to_groups(x):
    x = x.astype(jnp.float32)
    if BATCH_GROUPS == 1:
        return x.reshape(1, N_WINDOW, BATCH * FEATS)
    return (x.reshape(N_WINDOW, BATCH_GROUPS, BT, FEATS)
             .transpose(1, 0, 2, 3).reshape(BATCH_GROUPS, N_WINDOW, BTE))


def _from_groups(x):
    if BATCH_GROUPS == 1:
        return x.reshape(N_WINDOW, BATCH, FEATS)
    return (x.reshape(BATCH_GROUPS, N_WINDOW, BT, FEATS)
             .transpose(1, 0, 2, 3).reshape(N_WINDOW, BATCH, FEATS))


def tranad_basic_forward(src, tgt, slab):
    assert src.shape == (N_WINDOW, BATCH, FEATS), src.shape
    assert tgt.shape == (N_WINDOW, BATCH, FEATS), tgt.shape
    src_g, tgt_g = _to_groups(src), _to_groups(tgt)

    flops = (4 * 2 * N_WINDOW * BTE * 3 * BTE        # fused qkv projections (2 self + 2 cross)
             + 3 * 2 * N_WINDOW * BTE * BTE          # attention output projections
             + 2 * 2 * 2 * N_WINDOW * BTE * BTF      # two feed-forward blocks
             + 3 * 4 * N_WINDOW * N_WINDOW * BTE)    # scores / softmax / context elementwise
    cost = pl.CostEstimate(
        flops=BATCH_GROUPS * flops,
        transcendentals=BATCH_GROUPS * (3 * N_WINDOW * N_WINDOW * BTE + N_WINDOW * BTE),
        bytes_accessed=4 * (3 * BATCH_GROUPS * N_WINDOW * BTE + SLAB_ROWS * SLAB_COLS),
    )

    out = pl.pallas_call(
        tranad_kernel,
        out_shape=jax.ShapeDtypeStruct((BATCH_GROUPS, N_WINDOW, BTE), jnp.float32),
        grid=(BATCH_GROUPS,),
        in_specs=[
            pl.BlockSpec((None, N_WINDOW, BTE), lambda g: (g, 0, 0)),
            pl.BlockSpec((None, N_WINDOW, BTE), lambda g: (g, 0, 0)),
            # constant index -> the packed weight slab stays VMEM-resident across grid steps
            pl.BlockSpec((SLAB_ROWS, SLAB_COLS), lambda g: (0, 0)),
        ],
        out_specs=pl.BlockSpec((None, N_WINDOW, BTE), lambda g: (g, 0, 0)),
        compiler_params=pltpu.CompilerParams(dimension_semantics=("parallel",)),
        cost_estimate=cost,
    )(src_g, tgt_g, slab)
    return _from_groups(out)


def tranad_basic_reference(src, tgt, params):
    """Pure-JAX reference in the original (L, B, E) layout with the un-expanded weights."""
    E = FEATS

    def linear(x, w, b):                              # x (L, B, in), w (in, out), b (1, out)
        return jnp.einsum("lbi,io->lbo", x, w) + b

    def mha(xq, xkv, p):
        q = linear(xq, params[p + "_wq"], params[p + "_bq"])
        k = linear(xkv, params[p + "_wk"], params[p + "_bk"])
        v = linear(xkv, params[p + "_wv"], params[p + "_bv"])
        s = q[:, None, :, :] * k[None, :, :, :]       # (Lq, Lk, B, E): head_dim == 1 scores
        s = s - jnp.max(s, axis=1, keepdims=True)
        w = jnp.exp(s)
        attn = w / jnp.sum(w, axis=1, keepdims=True)
        ctx = jnp.sum(attn * v[None, :, :, :], axis=1)
        return linear(ctx, params[p + "_wo"], params[p + "_bo"])

    def ffn(x, p):
        return linear(linear(x, params[p + "_w1"], params[p + "_b1"]),
                      params[p + "_w2"], params[p + "_b2"])

    x = src.astype(jnp.float32) * math.sqrt(E) + params["pe"][:, None, :]
    x = x + mha(x, x, "enc_sa")
    x = x + ffn(x, "enc_ff")
    memory = x
    y = tgt.astype(jnp.float32)
    y = y + mha(y, y, "dec_sa")
    y = y + mha(y, memory, "dec_ca")
    y = y + ffn(y, "dec_ff")
    return 1.0 / (1.0 + jnp.exp(-y))


if __name__ == "__main__":
    key = jax.random.PRNGKey(0)
    kp, ks, kt = jax.random.split(key, 3)

    params = make_params(kp)
    slab = pack_params(params)

    src = jax.random.normal(ks, (N_WINDOW, BATCH, FEATS), jnp.float32)
    tgt = jax.random.normal(kt, (N_WINDOW, BATCH, FEATS), jnp.float32)

    forward = jax.jit(tranad_basic_forward)
    out = jax.block_until_ready(forward(src, tgt, slab))
    ref = jax.block_until_ready(tranad_basic_reference(src, tgt, params))

    assert out.shape == (N_WINDOW, BATCH, FEATS), out.shape
    np.testing.assert_allclose(np.asarray(out), np.asarray(ref), rtol=3e-3, atol=3e-3)
    print("KERNEL_OK")
</pallas_src>

<mosaic_0001>
module attributes {stable_mosaic.version = 11 : i64} {
  func.func @tranad_kernel(%arg0: i32, %arg1: memref<1x10x64xf32, #tpu.memory_space<vmem>>, %arg2: memref<1x10x64xf32, #tpu.memory_space<vmem>>, %arg3: memref<864x192xf32, #tpu.memory_space<vmem>>, %arg4: memref<1x10x64xf32, #tpu.memory_space<vmem>>) attributes {dimension_semantics = [#tpu.dimension_semantics<parallel>], iteration_bounds = array<i64: 1>, scalar_prefetch = 0 : i64, scratch_operands = 0 : i64, tpu.core_type = #tpu.core_type<tc>, window_params = [{transform_indices = @transform_0, window_bounds = array<i64: 1, 10, 64>}, {transform_indices = @transform_1, window_bounds = array<i64: 1, 10, 64>}, {pipeline_mode = #tpu.pipeline_mode<synchronous>, transform_indices = @transform_2, window_bounds = array<i64: 864, 192>}, {transform_indices = @transform_3, window_bounds = array<i64: 1, 10, 64>}]} {
    %c0 = arith.constant 0 : index
    %c0_0 = arith.constant 0 : index
    %c0_1 = arith.constant 0 : index
    %0 = vector.load %arg1[%c0, %c0_0, %c0_1] : memref<1x10x64xf32, #tpu.memory_space<vmem>>, vector<1x10x64xf32>
    %1 = vector.shape_cast %0 : vector<1x10x64xf32> to vector<10x64xf32>
    %cst = arith.constant 2.82842708 : f32
    %2 = vector.broadcast %cst : f32 to vector<10x64xf32>
    %3 = arith.mulf %1, %2 : vector<10x64xf32>
    %c0_2 = arith.constant 0 : index
    %c0_3 = arith.constant 0 : index
    %4 = vector.load %arg3[%c0_2, %c0_3] : memref<864x192xf32, #tpu.memory_space<vmem>>, vector<10x64xf32>
    %5 = arith.addf %3, %4 : vector<10x64xf32>
    %c16 = arith.constant 16 : index
    %c0_4 = arith.constant 0 : index
    %6 = vector.load %arg3[%c16, %c0_4] : memref<864x192xf32, #tpu.memory_space<vmem>>, vector<64x192xf32>
    %cst_5 = arith.constant dense<0.000000e+00> : vector<10x192xf32>
    %7 = tpu.matmul %5, %6, %cst_5 {dimension_numbers = #tpu.dot_dimension_numbers<[1], [0], [0], [1], [0, 0, 1, 1], [], []>} : vector<10x64xf32>, vector<64x192xf32>, vector<10x192xf32> -> vector<10x192xf32>
    %c80 = arith.constant 80 : index
    %c0_6 = arith.constant 0 : index
    %8 = vector.load %arg3[%c80, %c0_6] : memref<864x192xf32, #tpu.memory_space<vmem>>, vector<1x192xf32>
    %9 = vector.broadcast %8 : vector<1x192xf32> to vector<10x192xf32>
    %10 = arith.addf %7, %9 : vector<10x192xf32>
    %11 = vector.extract_strided_slice %10 {offsets = [0, 0], sizes = [10, 64], strides = [1, 1]} : vector<10x192xf32> to vector<10x64xf32>
    %12 = vector.extract_strided_slice %10 {offsets = [0, 64], sizes = [10, 64], strides = [1, 1]} : vector<10x192xf32> to vector<10x64xf32>
    %13 = vector.extract_strided_slice %10 {offsets = [0, 128], sizes = [10, 64], strides = [1, 1]} : vector<10x192xf32> to vector<10x64xf32>
    %14 = vector.shape_cast %11 : vector<10x64xf32> to vector<10x1x64xf32>
    %15 = vector.shape_cast %12 : vector<10x64xf32> to vector<1x10x64xf32>
    %16 = vector.broadcast %14 : vector<10x1x64xf32> to vector<10x10x64xf32>
    %17 = vector.broadcast %15 : vector<1x10x64xf32> to vector<10x10x64xf32>
    %18 = arith.mulf %16, %17 : vector<10x10x64xf32>
    %cst_7 = arith.constant dense<0xFF800000> : vector<10x64xf32>
    %19 = vector.multi_reduction <maximumf>, %18, %cst_7 [1] : vector<10x10x64xf32> to vector<10x64xf32>
    %20 = vector.shape_cast %19 : vector<10x64xf32> to vector<10x1x64xf32>
    %21 = vector.broadcast %20 : vector<10x1x64xf32> to vector<10x10x64xf32>
    %22 = arith.subf %18, %21 : vector<10x10x64xf32>
    %23 = math.exp %22 : vector<10x10x64xf32>
    %cst_8 = arith.constant dense<0.000000e+00> : vector<10x64xf32>
    %24 = vector.multi_reduction <add>, %23, %cst_8 [1] : vector<10x10x64xf32> to vector<10x64xf32>
    %25 = vector.shape_cast %24 : vector<10x64xf32> to vector<10x1x64xf32>
    %26 = vector.broadcast %25 : vector<10x1x64xf32> to vector<10x10x64xf32>
    %27 = arith.divf %23, %26 : vector<10x10x64xf32>
    %28 = vector.shape_cast %13 : vector<10x64xf32> to vector<1x10x64xf32>
    %29 = vector.broadcast %28 : vector<1x10x64xf32> to vector<10x10x64xf32>
    %30 = arith.mulf %27, %29 : vector<10x10x64xf32>
    %cst_9 = arith.constant dense<0.000000e+00> : vector<10x64xf32>
    %31 = vector.multi_reduction <add>, %30, %cst_9 [1] : vector<10x10x64xf32> to vector<10x64xf32>
    %c88 = arith.constant 88 : index
    %c0_10 = arith.constant 0 : index
    %32 = vector.load %arg3[%c88, %c0_10] : memref<864x192xf32, #tpu.memory_space<vmem>>, vector<64x64xf32>
    %cst_11 = arith.constant dense<0.000000e+00> : vector<10x64xf32>
    %33 = tpu.matmul %31, %32, %cst_11 {dimension_numbers = #tpu.dot_dimension_numbers<[1], [0], [0], [1], [0, 0, 1, 1], [], []>} : vector<10x64xf32>, vector<64x64xf32>, vector<10x64xf32> -> vector<10x64xf32>
    %c152 = arith.constant 152 : index
    %c0_12 = arith.constant 0 : index
    %34 = vector.load %arg3[%c152, %c0_12] : memref<864x192xf32, #tpu.memory_space<vmem>>, vector<1x64xf32>
    %35 = vector.broadcast %34 : vector<1x64xf32> to vector<10x64xf32>
    %36 = arith.addf %33, %35 : vector<10x64xf32>
    %37 = arith.addf %5, %36 : vector<10x64xf32>
    %c448 = arith.constant 448 : index
    %c0_13 = arith.constant 0 : index
    %38 = vector.load %arg3[%c448, %c0_13] : memref<864x192xf32, #tpu.memory_space<vmem>>, vector<64x128xf32>
    %cst_14 = arith.constant dense<0.000000e+00> : vector<10x128xf32>
    %39 = tpu.matmul %37, %38, %cst_14 {dimension_numbers = #tpu.dot_dimension_numbers<[1], [0], [0], [1], [0, 0, 1, 1], [], []>} : vector<10x64xf32>, vector<64x128xf32>, vector<10x128xf32> -> vector<10x128xf32>
    %c512 = arith.constant 512 : index
    %c0_15 = arith.constant 0 : index
    %40 = vector.load %arg3[%c512, %c0_15] : memref<864x192xf32, #tpu.memory_space<vmem>>, vector<1x128xf32>
    %41 = vector.broadcast %40 : vector<1x128xf32> to vector<10x128xf32>
    %42 = arith.addf %39, %41 : vector<10x128xf32>
    %c520 = arith.constant 520 : index
    %c0_16 = arith.constant 0 : index
    %43 = vector.load %arg3[%c520, %c0_16] : memref<864x192xf32, #tpu.memory_space<vmem>>, vector<128x64xf32>
    %cst_17 = arith.constant dense<0.000000e+00> : vector<10x64xf32>
    %44 = tpu.matmul %42, %43, %cst_17 {dimension_numbers = #tpu.dot_dimension_numbers<[1], [0], [0], [1], [0, 0, 1, 1], [], []>} : vector<10x128xf32>, vector<128x64xf32>, vector<10x64xf32> -> vector<10x64xf32>
    %c648 = arith.constant 648 : index
    %c0_18 = arith.constant 0 : index
    %45 = vector.load %arg3[%c648, %c0_18] : memref<864x192xf32, #tpu.memory_space<vmem>>, vector<1x64xf32>
    %46 = vector.broadcast %45 : vector<1x64xf32> to vector<10x64xf32>
    %47 = arith.addf %44, %46 : vector<10x64xf32>
    %48 = arith.addf %37, %47 : vector<10x64xf32>
    %c0_19 = arith.constant 0 : index
    %c0_20 = arith.constant 0 : index
    %c0_21 = arith.constant 0 : index
    %49 = vector.load %arg2[%c0_19, %c0_20, %c0_21] : memref<1x10x64xf32, #tpu.memory_space<vmem>>, vector<1x10x64xf32>
    %50 = vector.shape_cast %49 : vector<1x10x64xf32> to vector<10x64xf32>
    %c160 = arith.constant 160 : index
    %c0_22 = arith.constant 0 : index
    %51 = vector.load %arg3[%c160, %c0_22] : memref<864x192xf32, #tpu.memory_space<vmem>>, vector<64x192xf32>
    %cst_23 = arith.constant dense<0.000000e+00> : vector<10x192xf32>
    %52 = tpu.matmul %50, %51, %cst_23 {dimension_numbers = #tpu.dot_dimension_numbers<[1], [0], [0], [1], [0, 0, 1, 1], [], []>} : vector<10x64xf32>, vector<64x192xf32>, vector<10x192xf32> -> vector<10x192xf32>
    %c224 = arith.constant 224 : index
    %c0_24 = arith.constant 0 : index
    %53 = vector.load %arg3[%c224, %c0_24] : memref<864x192xf32, #tpu.memory_space<vmem>>, vector<1x192xf32>
    %54 = vector.broadcast %53 : vector<1x192xf32> to vector<10x192xf32>
    %55 = arith.addf %52, %54 : vector<10x192xf32>
    %56 = vector.extract_strided_slice %55 {offsets = [0, 0], sizes = [10, 64], strides = [1, 1]} : vector<10x192xf32> to vector<10x64xf32>
    %57 = vector.extract_strided_slice %55 {offsets = [0, 64], sizes = [10, 64], strides = [1, 1]} : vector<10x192xf32> to vector<10x64xf32>
    %58 = vector.extract_strided_slice %55 {offsets = [0, 128], sizes = [10, 64], strides = [1, 1]} : vector<10x192xf32> to vector<10x64xf32>
    %59 = vector.shape_cast %56 : vector<10x64xf32> to vector<10x1x64xf32>
    %60 = vector.shape_cast %57 : vector<10x64xf32> to vector<1x10x64xf32>
    %61 = vector.broadcast %59 : vector<10x1x64xf32> to vector<10x10x64xf32>
    %62 = vector.broadcast %60 : vector<1x10x64xf32> to vector<10x10x64xf32>
    %63 = arith.mulf %61, %62 : vector<10x10x64xf32>
    %cst_25 = arith.constant dense<0xFF800000> : vector<10x64xf32>
    %64 = vector.multi_reduction <maximumf>, %63, %cst_25 [1] : vector<10x10x64xf32> to vector<10x64xf32>
    %65 = vector.shape_cast %64 : vector<10x64xf32> to vector<10x1x64xf32>
    %66 = vector.broadcast %65 : vector<10x1x64xf32> to vector<10x10x64xf32>
    %67 = arith.subf %63, %66 : vector<10x10x64xf32>
    %68 = math.exp %67 : vector<10x10x64xf32>
    %cst_26 = arith.constant dense<0.000000e+00> : vector<10x64xf32>
    %69 = vector.multi_reduction <add>, %68, %cst_26 [1] : vector<10x10x64xf32> to vector<10x64xf32>
    %70 = vector.shape_cast %69 : vector<10x64xf32> to vector<10x1x64xf32>
    %71 = vector.broadcast %70 : vector<10x1x64xf32> to vector<10x10x64xf32>
    %72 = arith.divf %68, %71 : vector<10x10x64xf32>
    %73 = vector.shape_cast %58 : vector<10x64xf32> to vector<1x10x64xf32>
    %74 = vector.broadcast %73 : vector<1x10x64xf32> to vector<10x10x64xf32>
    %75 = arith.mulf %72, %74 : vector<10x10x64xf32>
    %cst_27 = arith.constant dense<0.000000e+00> : vector<10x64xf32>
    %76 = vector.multi_reduction <add>, %75, %cst_27 [1] : vector<10x10x64xf32> to vector<10x64xf32>
    %c232 = arith.constant 232 : index
    %c0_28 = arith.constant 0 : index
    %77 = vector.load %arg3[%c232, %c0_28] : memref<864x192xf32, #tpu.memory_space<vmem>>, vector<64x64xf32>
    %cst_29 = arith.constant dense<0.000000e+00> : vector<10x64xf32>
    %78 = tpu.matmul %76, %77, %cst_29 {dimension_numbers = #tpu.dot_dimension_numbers<[1], [0], [0], [1], [0, 0, 1, 1], [], []>} : vector<10x64xf32>, vector<64x64xf32>, vector<10x64xf32> -> vector<10x64xf32>
    %c296 = arith.constant 296 : index
    %c0_30 = arith.constant 0 : index
    %79 = vector.load %arg3[%c296, %c0_30] : memref<864x192xf32, #tpu.memory_space<vmem>>, vector<1x64xf32>
    %80 = vector.broadcast %79 : vector<1x64xf32> to vector<10x64xf32>
    %81 = arith.addf %78, %80 : vector<10x64xf32>
    %82 = arith.addf %50, %81 : vector<10x64xf32>
    %c304 = arith.constant 304 : index
    %c0_31 = arith.constant 0 : index
    %83 = vector.load %arg3[%c304, %c0_31] : memref<864x192xf32, #tpu.memory_space<vmem>>, vector<64x192xf32>
    %cst_32 = arith.constant dense<0.000000e+00> : vector<10x192xf32>
    %84 = tpu.matmul %82, %83, %cst_32 {dimension_numbers = #tpu.dot_dimension_numbers<[1], [0], [0], [1], [0, 0, 1, 1], [], []>} : vector<10x64xf32>, vector<64x192xf32>, vector<10x192xf32> -> vector<10x192xf32>
    %c368 = arith.constant 368 : index
    %c0_33 = arith.constant 0 : index
    %85 = vector.load %arg3[%c368, %c0_33] : memref<864x192xf32, #tpu.memory_space<vmem>>, vector<1x192xf32>
    %86 = vector.broadcast %85 : vector<1x192xf32> to vector<10x192xf32>
    %87 = arith.addf %84, %86 : vector<10x192xf32>
    %c304_34 = arith.constant 304 : index
    %c0_35 = arith.constant 0 : index
    %88 = vector.load %arg3[%c304_34, %c0_35] : memref<864x192xf32, #tpu.memory_space<vmem>>, vector<64x192xf32>
    %cst_36 = arith.constant dense<0.000000e+00> : vector<10x192xf32>
    %89 = tpu.matmul %48, %88, %cst_36 {dimension_numbers = #tpu.dot_dimension_numbers<[1], [0], [0], [1], [0, 0, 1, 1], [], []>} : vector<10x64xf32>, vector<64x192xf32>, vector<10x192xf32> -> vector<10x192xf32>
    %c368_37 = arith.constant 368 : index
    %c0_38 = arith.constant 0 : index
    %90 = vector.load %arg3[%c368_37, %c0_38] : memref<864x192xf32, #tpu.memory_space<vmem>>, vector<1x192xf32>
    %91 = vector.broadcast %90 : vector<1x192xf32> to vector<10x192xf32>
    %92 = arith.addf %89, %91 : vector<10x192xf32>
    %93 = vector.extract_strided_slice %87 {offsets = [0, 0], sizes = [10, 64], strides = [1, 1]} : vector<10x192xf32> to vector<10x64xf32>
    %94 = vector.extract_strided_slice %92 {offsets = [0, 64], sizes = [10, 64], strides = [1, 1]} : vector<10x192xf32> to vector<10x64xf32>
    %95 = vector.extract_strided_slice %92 {offsets = [0, 128], sizes = [10, 64], strides = [1, 1]} : vector<10x192xf32> to vector<10x64xf32>
    %96 = vector.shape_cast %93 : vector<10x64xf32> to vector<10x1x64xf32>
    %97 = vector.shape_cast %94 : vector<10x64xf32> to vector<1x10x64xf32>
    %98 = vector.broadcast %96 : vector<10x1x64xf32> to vector<10x10x64xf32>
    %99 = vector.broadcast %97 : vector<1x10x64xf32> to vector<10x10x64xf32>
    %100 = arith.mulf %98, %99 : vector<10x10x64xf32>
    %cst_39 = arith.constant dense<0xFF800000> : vector<10x64xf32>
    %101 = vector.multi_reduction <maximumf>, %100, %cst_39 [1] : vector<10x10x64xf32> to vector<10x64xf32>
    %102 = vector.shape_cast %101 : vector<10x64xf32> to vector<10x1x64xf32>
    %103 = vector.broadcast %102 : vector<10x1x64xf32> to vector<10x10x64xf32>
    %104 = arith.subf %100, %103 : vector<10x10x64xf32>
    %105 = math.exp %104 : vector<10x10x64xf32>
    %cst_40 = arith.constant dense<0.000000e+00> : vector<10x64xf32>
    %106 = vector.multi_reduction <add>, %105, %cst_40 [1] : vector<10x10x64xf32> to vector<10x64xf32>
    %107 = vector.shape_cast %106 : vector<10x64xf32> to vector<10x1x64xf32>
    %108 = vector.broadcast %107 : vector<10x1x64xf32> to vector<10x10x64xf32>
    %109 = arith.divf %105, %108 : vector<10x10x64xf32>
    %110 = vector.shape_cast %95 : vector<10x64xf32> to vector<1x10x64xf32>
    %111 = vector.broadcast %110 : vector<1x10x64xf32> to vector<10x10x64xf32>
    %112 = arith.mulf %109, %111 : vector<10x10x64xf32>
    %cst_41 = arith.constant dense<0.000000e+00> : vector<10x64xf32>
    %113 = vector.multi_reduction <add>, %112, %cst_41 [1] : vector<10x10x64xf32> to vector<10x64xf32>
    %c376 = arith.constant 376 : index
    %c0_42 = arith.constant 0 : index
    %114 = vector.load %arg3[%c376, %c0_42] : memref<864x192xf32, #tpu.memory_space<vmem>>, vector<64x64xf32>
    %cst_43 = arith.constant dense<0.000000e+00> : vector<10x64xf32>
    %115 = tpu.matmul %113, %114, %cst_43 {dimension_numbers = #tpu.dot_dimension_numbers<[1], [0], [0], [1], [0, 0, 1, 1], [], []>} : vector<10x64xf32>, vector<64x64xf32>, vector<10x64xf32> -> vector<10x64xf32>
    %c440 = arith.constant 440 : index
    %c0_44 = arith.constant 0 : index
    %116 = vector.load %arg3[%c440, %c0_44] : memref<864x192xf32, #tpu.memory_space<vmem>>, vector<1x64xf32>
    %117 = vector.broadcast %116 : vector<1x64xf32> to vector<10x64xf32>
    %118 = arith.addf %115, %117 : vector<10x64xf32>
    %119 = arith.addf %82, %118 : vector<10x64xf32>
    %c656 = arith.constant 656 : index
    %c0_45 = arith.constant 0 : index
    %120 = vector.load %arg3[%c656, %c0_45] : memref<864x192xf32, #tpu.memory_space<vmem>>, vector<64x128xf32>
    %cst_46 = arith.constant dense<0.000000e+00> : vector<10x128xf32>
    %121 = tpu.matmul %119, %120, %cst_46 {dimension_numbers = #tpu.dot_dimension_numbers<[1], [0], [0], [1], [0, 0, 1, 1], [], []>} : vector<10x64xf32>, vector<64x128xf32>, vector<10x128xf32> -> vector<10x128xf32>
    %c720 = arith.constant 720 : index
    %c0_47 = arith.constant 0 : index
    %122 = vector.load %arg3[%c720, %c0_47] : memref<864x192xf32, #tpu.memory_space<vmem>>, vector<1x128xf32>
    %123 = vector.broadcast %122 : vector<1x128xf32> to vector<10x128xf32>
    %124 = arith.addf %121, %123 : vector<10x128xf32>
    %c728 = arith.constant 728 : index
    %c0_48 = arith.constant 0 : index
    %125 = vector.load %arg3[%c728, %c0_48] : memref<864x192xf32, #tpu.memory_space<vmem>>, vector<128x64xf32>
    %cst_49 = arith.constant dense<0.000000e+00> : vector<10x64xf32>
    %126 = tpu.matmul %124, %125, %cst_49 {dimension_numbers = #tpu.dot_dimension_numbers<[1], [0], [0], [1], [0, 0, 1, 1], [], []>} : vector<10x128xf32>, vector<128x64xf32>, vector<10x64xf32> -> vector<10x64xf32>
    %c856 = arith.constant 856 : index
    %c0_50 = arith.constant 0 : index
    %127 = vector.load %arg3[%c856, %c0_50] : memref<864x192xf32, #tpu.memory_space<vmem>>, vector<1x64xf32>
    %128 = vector.broadcast %127 : vector<1x64xf32> to vector<10x64xf32>
    %129 = arith.addf %126, %128 : vector<10x64xf32>
    %130 = arith.addf %119, %129 : vector<10x64xf32>
    %cst_51 = arith.constant 0.000000e+00 : f32
    %131 = vector.broadcast %cst_51 : f32 to vector<10x64xf32>
    %132 = arith.subf %131, %130 : vector<10x64xf32>
    %133 = math.exp %132 : vector<10x64xf32>
    %cst_52 = arith.constant 1.000000e+00 : f32
    %134 = vector.broadcast %cst_52 : f32 to vector<10x64xf32>
    %135 = arith.addf %134, %133 : vector<10x64xf32>
    %cst_53 = arith.constant 1.000000e+00 : f32
    %136 = vector.broadcast %cst_53 : f32 to vector<10x64xf32>
    %137 = arith.divf %136, %135 : vector<10x64xf32>
    %c0_54 = arith.constant 0 : index
    %c0_55 = arith.constant 0 : index
    %c0_56 = arith.constant 0 : index
    %138 = vector.load %arg4[%c0_54, %c0_55, %c0_56] : memref<1x10x64xf32, #tpu.memory_space<vmem>>, vector<1x10x64xf32>
    %139 = vector.shape_cast %138 : vector<1x10x64xf32> to vector<10x64xf32>
    %140 = vector.shape_cast %137 : vector<10x64xf32> to vector<1x10x64xf32>
    tpu.vector_store %arg4[%c0_54, %c0_55, %c0_56], %140 {strides = array<i32>} : memref<1x10x64xf32, #tpu.memory_space<vmem>>, vector<1x10x64xf32>,
    return
  }
  func.func @transform_0(%arg0: i32) -> (i32, i32, i32) {
    %c0_i32 = arith.constant 0 : i32
    %c0_i32_0 = arith.constant 0 : i32
    %c0_i32_1 = arith.constant 0 : i32
    return %arg0, %c0_i32, %c0_i32_0 : i32, i32, i32
  }
  func.func @transform_1(%arg0: i32) -> (i32, i32, i32) {
    %c0_i32 = arith.constant 0 : i32
    %c0_i32_0 = arith.constant 0 : i32
    %c0_i32_1 = arith.constant 0 : i32
    return %arg0, %c0_i32, %c0_i32_0 : i32, i32, i32
  }
  func.func @transform_2(%arg0: i32) -> (i32, i32) {
    %c0_i32 = arith.constant 0 : i32
    %c0_i32_0 = arith.constant 0 : i32
    %c0_i32_1 = arith.constant 0 : i32
    return %c0_i32, %c0_i32_0 : i32, i32
  }
  func.func @transform_3(%arg0: i32) -> (i32, i32, i32) {
    %c0_i32 = arith.constant 0 : i32
    %c0_i32_0 = arith.constant 0 : i32
    %c0_i32_1 = arith.constant 0 : i32
    return %arg0, %c0_i32, %c0_i32_0 : i32, i32, i32
  }
}

</mosaic_0001>

<llo_original>
// kernel: tranad_basic_forward.1
$region0: #{tranad_basic_forward.1}
  #allocation0 [shape = 'u32[]', space=smem, size = 0x4, offset = 0x4, fixed_abs, tag = 'smem constant byte address 0x4 - core index']
  #allocation1 [shape = 'u32[72,128]{1,0:T(1,128)}', space=vmem, size = 0x9000, scoped, tag = 'internal scratch']
  %s0 = inlined_call_operand.vmem [shape: f32[1,10,64], index: 0, kind: input, shape index: {}]
  %s1 = inlined_call_operand.vmem [shape: f32[1,10,64], index: 1, kind: input, shape index: {}]
  %s2 = inlined_call_operand.vmem [shape: f32[864,192], index: 2, kind: input, shape index: {}]
  %s3 = inlined_call_operand.vmem [shape: f32[1,10,64], index: 3, kind: output, shape index: {}]
  %s4 = sld [smem:[#allocation0]]
  $region22: #{tranad_basic_forward.1} parent=0
    _
  %s6 = ssub.s32 1, %s4
  %s7 = scalar_select 0, %s6, %s4
  // Predicated region
  $region2: #{tranad_basic_forward.1} parent=0 // pred_check
    _
  $region3: #{tranad_basic_forward.1} parent=0 // pred_check_branch
    %9 = sbr.rel (0) target = $region5
  $region4: #{tranad_basic_forward.1} parent=0 // pred_region
    _
  $region5: #{tranad_basic_forward.1} parent=0 // pred_fallthru
    _
  // Predicated region
  $region6: #{tranad_basic_forward.1} parent=0 // pred_check
    _
  $region7: #{tranad_basic_forward.1} parent=0 // pred_check_branch
    %11 = sbr.rel (0) target = $region9
  $region8: #{tranad_basic_forward.1} parent=0 // pred_region
    _
  $region9: #{tranad_basic_forward.1} parent=0 // pred_fallthru
    _
  // Predicated region
  $region10: #{tranad_basic_forward.1} parent=0 // pred_check
    _
  $region11: #{tranad_basic_forward.1} parent=0 // pred_check_branch
    %13 = sbr.rel (0) target = $region13
  $region12: #{tranad_basic_forward.1} parent=0 // pred_region
    _
  $region13: #{tranad_basic_forward.1} parent=0 // pred_fallthru
    _
  %v14 = vld [vmem:[%s0] sm:$0xff]
  %v15 = vld [vmem:[%s0 + $0x8] sm:$0x3]
  %v16 = vmul.f32 %v14, 2.828427
  %v17 = vmul.f32 %v15, 2.828427
  %v18 = vld [vmem:[%s2] sm:$0xff]
  %v19 = vld [vmem:[%s2 + $0x10] sm:$0x3]
  %v20 = vadd.f32 %v16, %v18
  %v21 = vadd.f32 %v17, %v19
  %v22 = vld [vmem:[%s2 + $0x20] sm:$0xff]
  %v23 = vld [vmem:[%s2 + $0x28] sm:$0xff]
  %v24 = vld [vmem:[%s2 + $0x30] sm:$0xff]
  %v25 = vld [vmem:[%s2 + $0x38] sm:$0xff]
  %v26 = vld [vmem:[%s2 + $0x40] sm:$0xff]
  %v27 = vld [vmem:[%s2 + $0x48] sm:$0xff]
  %v28 = vld [vmem:[%s2 + $0x50] sm:$0xff]
  %v29 = vld [vmem:[%s2 + $0x58] sm:$0xff]
  %v30 = vld [vmem:[%s2 + $0x60] sm:$0xff]
  %v31 = vld [vmem:[%s2 + $0x68] sm:$0xff]
  %v32 = vld [vmem:[%s2 + $0x70] sm:$0xff]
  %v33 = vld [vmem:[%s2 + $0x78] sm:$0xff]
  %v34 = vld [vmem:[%s2 + $0x80] sm:$0xff]
  %v35 = vld [vmem:[%s2 + $0x88] sm:$0xff]
  %v36 = vld [vmem:[%s2 + $0x90] sm:$0xff]
  %v37 = vld [vmem:[%s2 + $0x98] sm:$0xff]
  %s38 = scalar_lea.vmem %s2, 160
  %v39 = vld [vmem:[%s38] ss:$8 sm:$0x3]
  %v41 = vperm.slane %v39, 0
  %v42 = vperm.slane %v39, 1
  %vm45 = vcmask 523264
  %v47 = vsel %vm45, %v20, 0
  %v50 = vsel %vm45, %v21, 0
  %52 = vmatpush.msra.mxu0 0.0
  %53 = vmatpush.msra.mxu0 0.0
  %54 = vmatpush.msra.mxu0 0.0
  %55 = vmatpush.msra.mxu0 0.0
  %56 = vmatpush.msra.mxu0 0.0
  %57 = vmatpush.msra.mxu0 0.0
  %58 = vmatpush.msra.mxu0 0.0
  %59 = vmatpush.msra.mxu0 0.0
  %60 = vmatpush.msra.mxu0 %v36
  %61 = vmatpush.msra.mxu0 %v34
  %62 = vmatpush.msra.mxu0 %v32
  %63 = vmatpush.msra.mxu0 %v30
  %64 = vmatpush.msra.mxu0 %v28
  %65 = vmatpush.msra.mxu0 %v26
  %66 = vmatpush.msra.mxu0 %v24
  %67 = vmatpush.msra.mxu0 %v22
  %68 = vmatmul.f32.gmra.mxu0 %v47
  %v69 = vpop.f32.mrf.mxu0
  %v70 = vadd.f32 %v41, %v69
  %71 = vmatmul.f32.gmra.mxu0 %v50
  %v72 = vpop.f32.mrf.mxu0
  %v73 = vadd.f32 %v41, %v72
  %74 = vdwg.mxu0
  %75 = vmatpush.msra.mxu0 0.0
  %76 = vmatpush.msra.mxu0 0.0
  %77 = vmatpush.msra.mxu0 0.0
  %78 = vmatpush.msra.mxu0 0.0
  %79 = vmatpush.msra.mxu0 0.0
  %80 = vmatpush.msra.mxu0 0.0
  %81 = vmatpush.msra.mxu0 0.0
  %82 = vmatpush.msra.mxu0 0.0
  %83 = vmatpush.msra.mxu0 %v37
  %84 = vmatpush.msra.mxu0 %v35
  %85 = vmatpush.msra.mxu0 %v33
  %86 = vmatpush.msra.mxu0 %v31
  %87 = vmatpush.msra.mxu0 %v29
  %88 = vmatpush.msra.mxu0 %v27
  %89 = vmatpush.msra.mxu0 %v25
  %90 = vmatpush.msra.mxu0 %v23
  %91 = vmatmul.f32.gmra.mxu0 %v47
  %v92 = vpop.f32.mrf.mxu0
  %v93 = vadd.f32 %v42, %v92
  %94 = vmatmul.f32.gmra.mxu0 %v50
  %v95 = vpop.f32.mrf.mxu0
  %v96 = vadd.f32 %v42, %v95
  %97 = vdwg.mxu0
  %v100 = vrot.slane %v70, 1
  %v101 = vrot.slane %v70, 2
  %v102 = vrot.slane %v70, 3
  %v103 = vrot.slane %v70, 4
  %v104 = vrot.slane %v70, 5
  %v105 = vrot.slane %v70, 6
  %v106 = vrot.slane %v70, 7
  %v107 = vrot.slane %v73, 1
  %v108 = vperm.slane %v70, 0
  %v109 = vperm.slane %v100, 0
  %v110 = vperm.slane %v101, 0
  %v111 = vperm.slane %v102, 0
  %v112 = vperm.slane %v103, 0
  %v113 = vperm.slane %v104, 0
  %v114 = vperm.slane %v105, 0
  %v115 = vperm.slane %v106, 0
  %v116 = vperm.slane %v73, 0
  %v117 = vperm.slane %v107, 0
  %128 = vrot.lane.b32.xlu0 %v70, 64
  %v129 = vpop.permute.xlu0 %128
  %130 = vrot.lane.b32.xlu0 %v73, 64
  %v131 = vpop.permute.xlu0 %130
  %v134 = vmul.f32 %v108, %v129
  %v135 = vmul.f32 %v108, %v131
  %v136 = vmul.f32 %v109, %v129
  %v137 = vmul.f32 %v109, %v131
  %v138 = vmul.f32 %v110, %v129
  %v139 = vmul.f32 %v110, %v131
  %v140 = vmul.f32 %v111, %v129
  %v141 = vmul.f32 %v111, %v131
  %v142 = vmul.f32 %v112, %v129
  %v143 = vmul.f32 %v112, %v131
  %v144 = vmul.f32 %v113, %v129
  %v145 = vmul.f32 %v113, %v131
  %v146 = vmul.f32 %v114, %v129
  %v147 = vmul.f32 %v114, %v131
  %v148 = vmul.f32 %v115, %v129
  %v149 = vmul.f32 %v115, %v131
  %v150 = vmul.f32 %v116, %v129
  %v151 = vmul.f32 %v116, %v131
  %v152 = vmul.f32 %v117, %v129
  %v153 = vmul.f32 %v117, %v131
  %v154 = vsel %vm45, %v134, -inf
  %vm155 = vcmask 517120
  %v156 = vsel %vm155, %v135, -inf
  %v157 = vmax.f32 %v154, %v156
  %v158 = vrot.slane %v157, 4
  %v159 = vmax.f32 %v157, %v158
  %v160 = vrot.slane %v159, 2
  %v161 = vmax.f32 %v159, %v160
  %v162 = vrot.slane %v161, 1
  %v163 = vmax.f32 %v161, %v162
  %v164 = vsel %vm45, %v136, -inf
  %v165 = vsel %vm155, %v137, -inf
  %v166 = vmax.f32 %v164, %v165
  %v167 = vrot.slane %v166, 4
  %v168 = vmax.f32 %v166, %v167
  %v169 = vrot.slane %v168, 2
  %v170 = vmax.f32 %v168, %v169
  %v171 = vrot.slane %v170, 1
  %v172 = vmax.f32 %v170, %v171
  %v173 = vsel %vm45, %v138, -inf
  %v174 = vsel %vm155, %v139, -inf
  %v175 = vmax.f32 %v173, %v174
  %v176 = vrot.slane %v175, 4
  %v177 = vmax.f32 %v175, %v176
  %v178 = vrot.slane %v177, 2
  %v179 = vmax.f32 %v177, %v178
  %v180 = vrot.slane %v179, 1
  %v181 = vmax.f32 %v179, %v180
  %v182 = vsel %vm45, %v140, -inf
  %v183 = vsel %vm155, %v141, -inf
  %v184 = vmax.f32 %v182, %v183
  %v185 = vrot.slane %v184, 4
  %v186 = vmax.f32 %v184, %v185
  %v187 = vrot.slane %v186, 2
  %v188 = vmax.f32 %v186, %v187
  %v189 = vrot.slane %v188, 1
  %v190 = vmax.f32 %v188, %v189
  %v191 = vsel %vm45, %v142, -inf
  %v192 = vsel %vm155, %v143, -inf
  %v193 = vmax.f32 %v191, %v192
  %v194 = vrot.slane %v193, 4
  %v195 = vmax.f32 %v193, %v194
  %v196 = vrot.slane %v195, 2
  %v197 = vmax.f32 %v195, %v196
  %v198 = vrot.slane %v197, 1
  %v199 = vmax.f32 %v197, %v198
  %v200 = vsel %vm45, %v144, -inf
  %v201 = vsel %vm155, %v145, -inf
  %v202 = vmax.f32 %v200, %v201
  %v203 = vrot.slane %v202, 4
  %v204 = vmax.f32 %v202, %v203
  %v205 = vrot.slane %v204, 2
  %v206 = vmax.f32 %v204, %v205
  %v207 = vrot.slane %v206, 1
  %v208 = vmax.f32 %v206, %v207
  %v209 = vsel %vm45, %v146, -inf
  %v210 = vsel %vm155, %v147, -inf
  %v211 = vmax.f32 %v209, %v210
  %v212 = vrot.slane %v211, 4
  %v213 = vmax.f32 %v211, %v212
  %v214 = vrot.slane %v213, 2
  %v215 = vmax.f32 %v213, %v214
  %v216 = vrot.slane %v215, 1
  %v217 = vmax.f32 %v215, %v216
  %v218 = vsel %vm45, %v148, -inf
  %v219 = vsel %vm155, %v149, -inf
  %v220 = vmax.f32 %v218, %v219
  %v221 = vrot.slane %v220, 4
  %v222 = vmax.f32 %v220, %v221
  %v223 = vrot.slane %v222, 2
  %v224 = vmax.f32 %v222, %v223
  %v225 = vrot.slane %v224, 1
  %v226 = vmax.f32 %v224, %v225
  %v227 = vsel %vm45, %v150, -inf
  %v228 = vsel %vm155, %v151, -inf
  %v229 = vmax.f32 %v227, %v228
  %v230 = vrot.slane %v229, 4
  %v231 = vmax.f32 %v229, %v230
  %v232 = vrot.slane %v231, 2
  %v233 = vmax.f32 %v231, %v232
  %v234 = vrot.slane %v233, 1
  %v235 = vmax.f32 %v233, %v234
  %v236 = vsel %vm45, %v152, -inf
  %v237 = vsel %vm155, %v153, -inf
  %v238 = vmax.f32 %v236, %v237
  %v239 = vrot.slane %v238, 4
  %v240 = vmax.f32 %v238, %v239
  %v241 = vrot.slane %v240, 2
  %v242 = vmax.f32 %v240, %v241
  %v243 = vrot.slane %v242, 1
  %v244 = vmax.f32 %v242, %v243
  %v245 = vsub.f32 %v134, %v163
  %v246 = vsub.f32 %v135, %v163
  %v247 = vsub.f32 %v136, %v172
  %v248 = vsub.f32 %v137, %v172
  %v249 = vsub.f32 %v138, %v181
  %v250 = vsub.f32 %v139, %v181
  %v251 = vsub.f32 %v140, %v190
  %v252 = vsub.f32 %v141, %v190
  %v253 = vsub.f32 %v142, %v199
  %v254 = vsub.f32 %v143, %v199
  %v255 = vsub.f32 %v144, %v208
  %v256 = vsub.f32 %v145, %v208
  %v257 = vsub.f32 %v146, %v217
  %v258 = vsub.f32 %v147, %v217
  %v259 = vsub.f32 %v148, %v226
  %v260 = vsub.f32 %v149, %v226
  %v261 = vsub.f32 %v150, %v235
  %v262 = vsub.f32 %v151, %v235
  %v263 = vsub.f32 %v152, %v244
  %v264 = vsub.f32 %v153, %v244
  %v265 = vmul.f32 %v245, 1.442695
  %v266 = vpow.pop %v265
  %v267 = vmul.f32 %v246, 1.442695
  %v268 = vpow.pop %v267
  %v269 = vmul.f32 %v247, 1.442695
  %v270 = vpow.pop %v269
  %v271 = vmul.f32 %v248, 1.442695
  %v272 = vpow.pop %v271
  %v273 = vmul.f32 %v249, 1.442695
  %v274 = vpow.pop %v273
  %v275 = vmul.f32 %v250, 1.442695
  %v276 = vpow.pop %v275
  %v277 = vmul.f32 %v251, 1.442695
  %v278 = vpow.pop %v277
  %v279 = vmul.f32 %v252, 1.442695
  %v280 = vpow.pop %v279
  %v281 = vmul.f32 %v253, 1.442695
  %v282 = vpow.pop %v281
  %v283 = vmul.f32 %v254, 1.442695
  %v284 = vpow.pop %v283
  %v285 = vmul.f32 %v255, 1.442695
  %v286 = vpow.pop %v285
  %v287 = vmul.f32 %v256, 1.442695
  %v288 = vpow.pop %v287
  %v289 = vmul.f32 %v257, 1.442695
  %v290 = vpow.pop %v289
  %v291 = vmul.f32 %v258, 1.442695
  %v292 = vpow.pop %v291
  %v293 = vmul.f32 %v259, 1.442695
  %v294 = vpow.pop %v293
  %v295 = vmul.f32 %v260, 1.442695
  %v296 = vpow.pop %v295
  %v297 = vmul.f32 %v261, 1.442695
  %v298 = vpow.pop %v297
  %v299 = vmul.f32 %v262, 1.442695
  %v300 = vpow.pop %v299
  %v301 = vmul.f32 %v263, 1.442695
  %v302 = vpow.pop %v301
  %v303 = vmul.f32 %v264, 1.442695
  %v304 = vpow.pop %v303
  %v305 = vsel %vm45, %v266, 0.0
  %v306 = vsel %vm155, %v268, 0.0
  %v307 = vadd.f32 %v305, %v306
  %v308 = vrot.slane %v307, 4
  %v309 = vadd.f32 %v307, %v308
  %v310 = vrot.slane %v309, 2
  %v311 = vadd.f32 %v309, %v310
  %v312 = vrot.slane %v311, 1
  %v313 = vadd.f32 %v311, %v312
  %v314 = vsel %vm45, %v270, 0.0
  %v315 = vsel %vm155, %v272, 0.0
  %v316 = vadd.f32 %v314, %v315
  %v317 = vrot.slane %v316, 4
  %v318 = vadd.f32 %v316, %v317
  %v319 = vrot.slane %v318, 2
  %v320 = vadd.f32 %v318, %v319
  %v321 = vrot.slane %v320, 1
  %v322 = vadd.f32 %v320, %v321
  %v323 = vsel %vm45, %v274, 0.0
  %v324 = vsel %vm155, %v276, 0.0
  %v325 = vadd.f32 %v323, %v324
  %v326 = vrot.slane %v325, 4
  %v327 = vadd.f32 %v325, %v326
  %v328 = vrot.slane %v327, 2
  %v329 = vadd.f32 %v327, %v328
  %v330 = vrot.slane %v329, 1
  %v331 = vadd.f32 %v329, %v330
  %v332 = vsel %vm45, %v278, 0.0
  %v333 = vsel %vm155, %v280, 0.0
  %v334 = vadd.f32 %v332, %v333
  %v335 = vrot.slane %v334, 4
  %v336 = vadd.f32 %v334, %v335
  %v337 = vrot.slane %v336, 2
  %v338 = vadd.f32 %v336, %v337
  %v339 = vrot.slane %v338, 1
  %v340 = vadd.f32 %v338, %v339
  %v341 = vsel %vm45, %v282, 0.0
  %v342 = vsel %vm155, %v284, 0.0
  %v343 = vadd.f32 %v341, %v342
  %v344 = vrot.slane %v343, 4
  %v345 = vadd.f32 %v343, %v344
  %v346 = vrot.slane %v345, 2
  %v347 = vadd.f32 %v345, %v346
  %v348 = vrot.slane %v347, 1
  %v349 = vadd.f32 %v347, %v348
  %v350 = vsel %vm45, %v286, 0.0
  %v351 = vsel %vm155, %v288, 0.0
  %v352 = vadd.f32 %v350, %v351
  %v353 = vrot.slane %v352, 4
  %v354 = vadd.f32 %v352, %v353
  %v355 = vrot.slane %v354, 2
  %v356 = vadd.f32 %v354, %v355
  %v357 = vrot.slane %v356, 1
  %v358 = vadd.f32 %v356, %v357
  %v359 = vsel %vm45, %v290, 0.0
  %v360 = vsel %vm155, %v292, 0.0
  %v361 = vadd.f32 %v359, %v360
  %v362 = vrot.slane %v361, 4
  %v363 = vadd.f32 %v361, %v362
  %v364 = vrot.slane %v363, 2
  %v365 = vadd.f32 %v363, %v364
  %v366 = vrot.slane %v365, 1
  %v367 = vadd.f32 %v365, %v366
  %v368 = vsel %vm45, %v294, 0.0
  %v369 = vsel %vm155, %v296, 0.0
  %v370 = vadd.f32 %v368, %v369
  %v371 = vrot.slane %v370, 4
  %v372 = vadd.f32 %v370, %v371
  %v373 = vrot.slane %v372, 2
  %v374 = vadd.f32 %v372, %v373
  %v375 = vrot.slane %v374, 1
  %v376 = vadd.f32 %v374, %v375
  %v377 = vsel %vm45, %v298, 0.0
  %v378 = vsel %vm155, %v300, 0.0
  %v379 = vadd.f32 %v377, %v378
  %v380 = vrot.slane %v379, 4
  %v381 = vadd.f32 %v379, %v380
  %v382 = vrot.slane %v381, 2
  %v383 = vadd.f32 %v381, %v382
  %v384 = vrot.slane %v383, 1
  %v385 = vadd.f32 %v383, %v384
  %v386 = vsel %vm45, %v302, 0.0
  %v387 = vsel %vm155, %v304, 0.0
  %v388 = vadd.f32 %v386, %v387
  %v389 = vrot.slane %v388, 4
  %v390 = vadd.f32 %v388, %v389
  %v391 = vrot.slane %v390, 2
  %v392 = vadd.f32 %v390, %v391
  %v393 = vrot.slane %v392, 1
  %v394 = vadd.f32 %v392, %v393
  %v395 = vrcp.pop %v313
  %v396 = vmul.f32 %v313, %v395
  %v397 = vsub.f32 1.0, %v396
  %v398 = vmul.f32 %v395, %v397
  %v399 = vadd.f32 %v395, %v398
  %vm400 = vweird.f32 %v313
  %vm401 = vweird.f32 %v395
  %vm402 = vmor %vm400, %vm401
  %v403 = vsel %vm402, %v395, %v399
  %v404 = vand.u32 2147483647, %v313
  %vm405 = vcmp.eq.f32.partialorder %v404, 8.507059e+37
  %v406 = vand.u32 %v313, 2147483648
  %v407 = vor.u32 1.1754944e-38, %v406
  %v408 = vsel %vm405, %v407, %v403
  %v409 = vmul.f32 %v266, %v408
  %v410 = vmul.f32 %v268, %v408
  %v411 = vrcp.pop %v322
  %v412 = vmul.f32 %v322, %v411
  %v413 = vsub.f32 1.0, %v412
  %v414 = vmul.f32 %v411, %v413
  %v415 = vadd.f32 %v411, %v414
  %vm416 = vweird.f32 %v322
  %vm417 = vweird.f32 %v411
  %vm418 = vmor %vm416, %vm417
  %v419 = vsel %vm418, %v411, %v415
  %v420 = vand.u32 2147483647, %v322
  %vm421 = vcmp.eq.f32.partialorder %v420, 8.507059e+37
  %v422 = vand.u32 %v322, 2147483648
  %v423 = vor.u32 1.1754944e-38, %v422
  %v424 = vsel %vm421, %v423, %v419
  %v425 = vmul.f32 %v270, %v424
  %v426 = vmul.f32 %v272, %v424
  %v427 = vrcp.pop %v331
  %v428 = vmul.f32 %v331, %v427
  %v429 = vsub.f32 1.0, %v428
  %v430 = vmul.f32 %v427, %v429
  %v431 = vadd.f32 %v427, %v430
  %vm432 = vweird.f32 %v331
  %vm433 = vweird.f32 %v427
  %vm434 = vmor %vm432, %vm433
  %v435 = vsel %vm434, %v427, %v431
  %v436 = vand.u32 2147483647, %v331
  %vm437 = vcmp.eq.f32.partialorder %v436, 8.507059e+37
  %v438 = vand.u32 %v331, 2147483648
  %v439 = vor.u32 1.1754944e-38, %v438
  %v440 = vsel %vm437, %v439, %v435
  %v441 = vmul.f32 %v274, %v440
  %v442 = vmul.f32 %v276, %v440
  %v443 = vrcp.pop %v340
  %v444 = vmul.f32 %v340, %v443
  %v445 = vsub.f32 1.0, %v444
  %v446 = vmul.f32 %v443, %v445
  %v447 = vadd.f32 %v443, %v446
  %vm448 = vweird.f32 %v340
  %vm449 = vweird.f32 %v443
  %vm450 = vmor %vm448, %vm449
  %v451 = vsel %vm450, %v443, %v447
  %v452 = vand.u32 2147483647, %v340
  %vm453 = vcmp.eq.f32.partialorder %v452, 8.507059e+37
  %v454 = vand.u32 %v340, 2147483648
  %v455 = vor.u32 1.1754944e-38, %v454
  %v456 = vsel %vm453, %v455, %v451
  %v457 = vmul.f32 %v278, %v456
  %v458 = vmul.f32 %v280, %v456
  %v459 = vrcp.pop %v349
  %v460 = vmul.f32 %v349, %v459
  %v461 = vsub.f32 1.0, %v460
  %v462 = vmul.f32 %v459, %v461
  %v463 = vadd.f32 %v459, %v462
  %vm464 = vweird.f32 %v349
  %vm465 = vweird.f32 %v459
  %vm466 = vmor %vm464, %vm465
  %v467 = vsel %vm466, %v459, %v463
  %v468 = vand.u32 2147483647, %v349
  %vm469 = vcmp.eq.f32.partialorder %v468, 8.507059e+37
  %v470 = vand.u32 %v349, 2147483648
  %v471 = vor.u32 1.1754944e-38, %v470
  %v472 = vsel %vm469, %v471, %v467
  %v473 = vmul.f32 %v282, %v472
  %v474 = vmul.f32 %v284, %v472
  %v475 = vrcp.pop %v358
  %v476 = vmul.f32 %v358, %v475
  %v477 = vsub.f32 1.0, %v476
  %v478 = vmul.f32 %v475, %v477
  %v479 = vadd.f32 %v475, %v478
  %vm480 = vweird.f32 %v358
  %vm481 = vweird.f32 %v475
  %vm482 = vmor %vm480, %vm481
  %v483 = vsel %vm482, %v475, %v479
  %v484 = vand.u32 2147483647, %v358
  %vm485 = vcmp.eq.f32.partialorder %v484, 8.507059e+37
  %v486 = vand.u32 %v358, 2147483648
  %v487 = vor.u32 1.1754944e-38, %v486
  %v488 = vsel %vm485, %v487, %v483
  %v489 = vmul.f32 %v286, %v488
  %v490 = vmul.f32 %v288, %v488
  %v491 = vrcp.pop %v367
  %v492 = vmul.f32 %v367, %v491
  %v493 = vsub.f32 1.0, %v492
  %v494 = vmul.f32 %v491, %v493
  %v495 = vadd.f32 %v491, %v494
  %vm496 = vweird.f32 %v367
  %vm497 = vweird.f32 %v491
  %vm498 = vmor %vm496, %vm497
  %v499 = vsel %vm498, %v491, %v495
  %v500 = vand.u32 2147483647, %v367
  %vm501 = vcmp.eq.f32.partialorder %v500, 8.507059e+37
  %v502 = vand.u32 %v367, 2147483648
  %v503 = vor.u32 1.1754944e-38, %v502
  %v504 = vsel %vm501, %v503, %v499
  %v505 = vmul.f32 %v290, %v504
  %v506 = vmul.f32 %v292, %v504
  %v507 = vrcp.pop %v376
  %v508 = vmul.f32 %v376, %v507
  %v509 = vsub.f32 1.0, %v508
  %v510 = vmul.f32 %v507, %v509
  %v511 = vadd.f32 %v507, %v510
  %vm512 = vweird.f32 %v376
  %vm513 = vweird.f32 %v507
  %vm514 = vmor %vm512, %vm513
  %v515 = vsel %vm514, %v507, %v511
  %v516 = vand.u32 2147483647, %v376
  %vm517 = vcmp.eq.f32.partialorder %v516, 8.507059e+37
  %v518 = vand.u32 %v376, 2147483648
  %v519 = vor.u32 1.1754944e-38, %v518
  %v520 = vsel %vm517, %v519, %v515
  %v521 = vmul.f32 %v294, %v520
  %v522 = vmul.f32 %v296, %v520
  %v523 = vrcp.pop %v385
  %v524 = vmul.f32 %v385, %v523
  %v525 = vsub.f32 1.0, %v524
  %v526 = vmul.f32 %v523, %v525
  %v527 = vadd.f32 %v523, %v526
  %vm528 = vweird.f32 %v385
  %vm529 = vweird.f32 %v523
  %vm530 = vmor %vm528, %vm529
  %v531 = vsel %vm530, %v523, %v527
  %v532 = vand.u32 2147483647, %v385
  %vm533 = vcmp.eq.f32.partialorder %v532, 8.507059e+37
  %v534 = vand.u32 %v385, 2147483648
  %v535 = vor.u32 1.1754944e-38, %v534
  %v536 = vsel %vm533, %v535, %v531
  %v537 = vmul.f32 %v298, %v536
  %v538 = vmul.f32 %v300, %v536
  %v539 = vrcp.pop %v394
  %v540 = vmul.f32 %v394, %v539
  %v541 = vsub.f32 1.0, %v540
  %v542 = vmul.f32 %v539, %v541
  %v543 = vadd.f32 %v539, %v542
  %vm544 = vweird.f32 %v394
  %vm545 = vweird.f32 %v539
  %vm546 = vmor %vm544, %vm545
  %v547 = vsel %vm546, %v539, %v543
  %v548 = vand.u32 2147483647, %v394
  %vm549 = vcmp.eq.f32.partialorder %v548, 8.507059e+37
  %v550 = vand.u32 %v394, 2147483648
  %v551 = vor.u32 1.1754944e-38, %v550
  %v552 = vsel %vm549, %v551, %v547
  %v553 = vmul.f32 %v302, %v552
  %v554 = vmul.f32 %v304, %v552
  %v555 = vmul.f32 %v409, %v93
  %v556 = vmul.f32 %v410, %v96
  %v557 = vmul.f32 %v425, %v93
  %v558 = vmul.f32 %v426, %v96
  %v559 = vmul.f32 %v441, %v93
  %v560 = vmul.f32 %v442, %v96
  %v561 = vmul.f32 %v457, %v93
  %v562 = vmul.f32 %v458, %v96
  %v563 = vmul.f32 %v473, %v93
  %v564 = vmul.f32 %v474, %v96
  %v565 = vmul.f32 %v489, %v93
  %v566 = vmul.f32 %v490, %v96
  %v567 = vmul.f32 %v505, %v93
  %v568 = vmul.f32 %v506, %v96
  %v569 = vmul.f32 %v521, %v93
  %v570 = vmul.f32 %v522, %v96
  %v571 = vmul.f32 %v537, %v93
  %v572 = vmul.f32 %v538, %v96
  %v573 = vmul.f32 %v553, %v93
  %v574 = vmul.f32 %v554, %v96
  %v575 = vsel %vm45, %v555, 0.0
  %v576 = vsel %vm155, %v556, 0.0
  %v577 = vadd.f32 %v575, %v576
  %v578 = vrot.slane %v577, 4
  %v579 = vadd.f32 %v577, %v578
  %v580 = vrot.slane %v579, 2
  %v581 = vadd.f32 %v579, %v580
  %v582 = vrot.slane %v581, 1
  %v583 = vadd.f32 %v581, %v582
  %v584 = vsel %vm45, %v557, 0.0
  %v585 = vsel %vm155, %v558, 0.0
  %v586 = vadd.f32 %v584, %v585
  %v587 = vrot.slane %v586, 4
  %v588 = vadd.f32 %v586, %v587
  %v589 = vrot.slane %v588, 2
  %v590 = vadd.f32 %v588, %v589
  %v591 = vrot.slane %v590, 1
  %v592 = vadd.f32 %v590, %v591
  %v593 = vsel %vm45, %v559, 0.0
  %v594 = vsel %vm155, %v560, 0.0
  %v595 = vadd.f32 %v593, %v594
  %v596 = vrot.slane %v595, 4
  %v597 = vadd.f32 %v595, %v596
  %v598 = vrot.slane %v597, 2
  %v599 = vadd.f32 %v597, %v598
  %v600 = vrot.slane %v599, 1
  %v601 = vadd.f32 %v599, %v600
  %v602 = vsel %vm45, %v561, 0.0
  %v603 = vsel %vm155, %v562, 0.0
  %v604 = vadd.f32 %v602, %v603
  %v605 = vrot.slane %v604, 4
  %v606 = vadd.f32 %v604, %v605
  %v607 = vrot.slane %v606, 2
  %v608 = vadd.f32 %v606, %v607
  %v609 = vrot.slane %v608, 1
  %v610 = vadd.f32 %v608, %v609
  %v611 = vsel %vm45, %v563, 0.0
  %v612 = vsel %vm155, %v564, 0.0
  %v613 = vadd.f32 %v611, %v612
  %v614 = vrot.slane %v613, 4
  %v615 = vadd.f32 %v613, %v614
  %v616 = vrot.slane %v615, 2
  %v617 = vadd.f32 %v615, %v616
  %v618 = vrot.slane %v617, 1
  %v619 = vadd.f32 %v617, %v618
  %v620 = vsel %vm45, %v565, 0.0
  %v621 = vsel %vm155, %v566, 0.0
  %v622 = vadd.f32 %v620, %v621
  %v623 = vrot.slane %v622, 4
  %v624 = vadd.f32 %v622, %v623
  %v625 = vrot.slane %v624, 2
  %v626 = vadd.f32 %v624, %v625
  %v627 = vrot.slane %v626, 1
  %v628 = vadd.f32 %v626, %v627
  %v629 = vsel %vm45, %v567, 0.0
  %v630 = vsel %vm155, %v568, 0.0
  %v631 = vadd.f32 %v629, %v630
  %v632 = vrot.slane %v631, 4
  %v633 = vadd.f32 %v631, %v632
  %v634 = vrot.slane %v633, 2
  %v635 = vadd.f32 %v633, %v634
  %v636 = vrot.slane %v635, 1
  %v637 = vadd.f32 %v635, %v636
  %v638 = vsel %vm45, %v569, 0.0
  %v639 = vsel %vm155, %v570, 0.0
  %v640 = vadd.f32 %v638, %v639
  %v641 = vrot.slane %v640, 4
  %v642 = vadd.f32 %v640, %v641
  %v643 = vrot.slane %v642, 2
  %v644 = vadd.f32 %v642, %v643
  %v645 = vrot.slane %v644, 1
  %v646 = vadd.f32 %v644, %v645
  %v647 = vsel %vm45, %v571, 0.0
  %v648 = vsel %vm155, %v572, 0.0
  %v649 = vadd.f32 %v647, %v648
  %v650 = vrot.slane %v649, 4
  %v651 = vadd.f32 %v649, %v650
  %v652 = vrot.slane %v651, 2
  %v653 = vadd.f32 %v651, %v652
  %v654 = vrot.slane %v653, 1
  %v655 = vadd.f32 %v653, %v654
  %v656 = vsel %vm45, %v573, 0.0
  %v657 = vsel %vm155, %v574, 0.0
  %v658 = vadd.f32 %v656, %v657
  %v659 = vrot.slane %v658, 4
  %v660 = vadd.f32 %v658, %v659
  %v661 = vrot.slane %v660, 2
  %v662 = vadd.f32 %v660, %v661
  %v663 = vrot.slane %v662, 1
  %v664 = vadd.f32 %v662, %v663
  %v665 = vld [vmem:[%s2 + $0xb0] sm:$0xff]
  %v666 = vld [vmem:[%s2 + $0xc0] sm:$0xff]
  %v667 = vld [vmem:[%s2 + $0xd0] sm:$0xff]
  %v668 = vld [vmem:[%s2 + $0xe0] sm:$0xff]
  %v669 = vld [vmem:[%s2 + $0xf0] sm:$0xff]
  %v670 = vld [vmem:[%s2 + $0x100] sm:$0xff]
  %v671 = vld [vmem:[%s2 + $0x110] sm:$0xff]
  %v672 = vld [vmem:[%s2 + $0x120] sm:$0xff]
  %v673 = vld [vmem:[%s2 + $0x130] ss:$0 sm:$0xff]
  %vm684 = vcmask 1041409
  %v685 = vsel %vm684, %v592, %v583
  %vm686 = vcmask 1042434
  %v687 = vsel %vm686, %v601, %v685
  %vm688 = vcmask 1043459
  %v689 = vsel %vm688, %v610, %v687
  %vm690 = vcmask 1044484
  %v691 = vsel %vm690, %v619, %v689
  %vm692 = vcmask 1045509
  %v693 = vsel %vm692, %v628, %v691
  %vm694 = vcmask 1046534
  %v695 = vsel %vm694, %v637, %v693
  %vm696 = vcmask 1047559
  %v697 = vsel %vm696, %v646, %v695
  %v698 = vsel %vm684, %v664, %v655
  %v699 = vsel %vm45, %v697, 0
  %v701 = vsel %vm45, %v698, 0
  %703 = vmatpush.msra.mxu0 0.0
  %704 = vmatpush.msra.mxu0 0.0
  %705 = vmatpush.msra.mxu0 0.0
  %706 = vmatpush.msra.mxu0 0.0
  %707 = vmatpush.msra.mxu0 0.0
  %708 = vmatpush.msra.mxu0 0.0
  %709 = vmatpush.msra.mxu0 0.0
  %710 = vmatpush.msra.mxu0 0.0
  %711 = vmatpush.msra.mxu0 %v672
  %712 = vmatpush.msra.mxu0 %v671
  %713 = vmatpush.msra.mxu0 %v670
  %714 = vmatpush.msra.mxu0 %v669
  %715 = vmatpush.msra.mxu0 %v668
  %716 = vmatpush.msra.mxu0 %v667
  %717 = vmatpush.msra.mxu0 %v666
  %718 = vmatpush.msra.mxu0 %v665
  %719 = vmatmul.f32.gmra.mxu0 %v699
  %v720 = vpop.f32.mrf.mxu0
  %v721 = vadd.f32 %v673, %v720
  %722 = vmatmul.f32.gmra.mxu0 %v701
  %v723 = vpop.f32.mrf.mxu0
  %v724 = vadd.f32 %v673, %v723
  %725 = vdwg.mxu0
  %v726 = vadd.f32 %v20, %v721
  %v727 = vadd.f32 %v21, %v724
  %v728 = vld [vmem:[%s2 + $0x380] sm:$0xff]
  %v729 = vld [vmem:[%s2 + $0x390] sm:$0xff]
  %v730 = vld [vmem:[%s2 + $0x3a0] sm:$0xff]
  %v731 = vld [vmem:[%s2 + $0x3b0] sm:$0xff]
  %v732 = vld [vmem:[%s2 + $0x3c0] sm:$0xff]
  %v733 = vld [vmem:[%s2 + $0x3d0] sm:$0xff]
  %v734 = vld [vmem:[%s2 + $0x3e0] sm:$0xff]
  %v735 = vld [vmem:[%s2 + $0x3f0] sm:$0xff]
  %v736 = vld [vmem:[%s2 + $0x400] ss:$0 sm:$0xff]
  %v738 = vsel %vm45, %v726, 0
  %v741 = vsel %vm45, %v727, 0
  %743 = vmatpush.msra.mxu0 0.0
  %744 = vmatpush.msra.mxu0 0.0
  %745 = vmatpush.msra.mxu0 0.0
  %746 = vmatpush.msra.mxu0 0.0
  %747 = vmatpush.msra.mxu0 0.0
  %748 = vmatpush.msra.mxu0 0.0
  %749 = vmatpush.msra.mxu0 0.0
  %750 = vmatpush.msra.mxu0 0.0
  %751 = vmatpush.msra.mxu0 %v735
  %752 = vmatpush.msra.mxu0 %v734
  %753 = vmatpush.msra.mxu0 %v733
  %754 = vmatpush.msra.mxu0 %v732
  %755 = vmatpush.msra.mxu0 %v731
  %756 = vmatpush.msra.mxu0 %v730
  %757 = vmatpush.msra.mxu0 %v729
  %758 = vmatpush.msra.mxu0 %v728
  %759 = vmatmul.f32.gmra.mxu0 %v738
  %v760 = vpop.f32.mrf.mxu0
  %v761 = vadd.f32 %v736, %v760
  %762 = vmatmul.f32.gmra.mxu0 %v741
  %v763 = vpop.f32.mrf.mxu0
  %v764 = vadd.f32 %v736, %v763
  %765 = vdwg.mxu0
  %v766 = vld [vmem:[%s2 + $0x410] sm:$0xff]
  %v767 = vld [vmem:[%s2 + $0x420] sm:$0xff]
  %v768 = vld [vmem:[%s2 + $0x430] sm:$0xff]
  %v769 = vld [vmem:[%s2 + $0x440] sm:$0xff]
  %v770 = vld [vmem:[%s2 + $0x450] sm:$0xff]
  %v771 = vld [vmem:[%s2 + $0x460] sm:$0xff]
  %v772 = vld [vmem:[%s2 + $0x470] sm:$0xff]
  %v773 = vld [vmem:[%s2 + $0x480] sm:$0xff]
  %v774 = vld [vmem:[%s2 + $0x490] sm:$0xff]
  %v775 = vld [vmem:[%s2 + $0x4a0] sm:$0xff]
  %v776 = vld [vmem:[%s2 + $0x4b0] sm:$0xff]
  %v777 = vld [vmem:[%s2 + $0x4c0] sm:$0xff]
  %v778 = vld [vmem:[%s2 + $0x4d0] sm:$0xff]
  %v779 = vld [vmem:[%s2 + $0x4e0] sm:$0xff]
  %v780 = vld [vmem:[%s2 + $0x4f0] sm:$0xff]
  %v781 = vld [vmem:[%s2 + $0x500] sm:$0xff]
  %v782 = vld [vmem:[%s2 + $0x510] ss:$0 sm:$0xff]
  %783 = vmatpush.msra.mxu0 %v781
  %784 = vmatpush.msra.mxu0 %v780
  %785 = vmatpush.msra.mxu0 %v779
  %786 = vmatpush.msra.mxu0 %v778
  %787 = vmatpush.msra.mxu0 %v777
  %788 = vmatpush.msra.mxu0 %v776
  %789 = vmatpush.msra.mxu0 %v775
  %790 = vmatpush.msra.mxu0 %v774
  %791 = vmatpush.msra.mxu0 %v773
  %792 = vmatpush.msra.mxu0 %v772
  %793 = vmatpush.msra.mxu0 %v771
  %794 = vmatpush.msra.mxu0 %v770
  %795 = vmatpush.msra.mxu0 %v769
  %796 = vmatpush.msra.mxu0 %v768
  %797 = vmatpush.msra.mxu0 %v767
  %798 = vmatpush.msra.mxu0 %v766
  %799 = vmatmul.f32.gmra.mxu0 %v761
  %v800 = vpop.f32.mrf.mxu0
  %v801 = vadd.f32 %v782, %v800
  %802 = vmatmul.f32.gmra.mxu0 %v764
  %v803 = vpop.f32.mrf.mxu0
  %v804 = vadd.f32 %v782, %v803
  %805 = vdwg.mxu0
  %v806 = vadd.f32 %v726, %v801
  %v807 = vadd.f32 %v727, %v804
  %v808 = vld [vmem:[%s1] sm:$0xff]
  %v809 = vld [vmem:[%s1 + $0x8] sm:$0x3]
  %v810 = vld [vmem:[%s2 + $0x140] sm:$0xff]
  %v811 = vld [vmem:[%s2 + $0x148] sm:$0xff]
  %v812 = vld [vmem:[%s2 + $0x150] sm:$0xff]
  %v813 = vld [vmem:[%s2 + $0x158] sm:$0xff]
  %v814 = vld [vmem:[%s2 + $0x160] sm:$0xff]
  %v815 = vld [vmem:[%s2 + $0x168] sm:$0xff]
  %v816 = vld [vmem:[%s2 + $0x170] sm:$0xff]
  %v817 = vld [vmem:[%s2 + $0x178] sm:$0xff]
  %v818 = vld [vmem:[%s2 + $0x180] sm:$0xff]
  %v819 = vld [vmem:[%s2 + $0x188] sm:$0xff]
  %v820 = vld [vmem:[%s2 + $0x190] sm:$0xff]
  %v821 = vld [vmem:[%s2 + $0x198] sm:$0xff]
  %v822 = vld [vmem:[%s2 + $0x1a0] sm:$0xff]
  %v823 = vld [vmem:[%s2 + $0x1a8] sm:$0xff]
  %v824 = vld [vmem:[%s2 + $0x1b0] sm:$0xff]
  %v825 = vld [vmem:[%s2 + $0x1b8] sm:$0xff]
  %s826 = scalar_lea.vmem %s2, 448
  %v827 = vld [vmem:[%s826] ss:$8 sm:$0x3]
  %v829 = vperm.slane %v827, 0
  %v830 = vperm.slane %v827, 1
  %v834 = vsel %vm45, %v808, 0
  %v837 = vsel %vm45, %v809, 0
  %839 = vmatpush.msra.mxu0 0.0
  %840 = vmatpush.msra.mxu0 0.0
  %841 = vmatpush.msra.mxu0 0.0
  %842 = vmatpush.msra.mxu0 0.0
  %843 = vmatpush.msra.mxu0 0.0
  %844 = vmatpush.msra.mxu0 0.0
  %845 = vmatpush.msra.mxu0 0.0
  %846 = vmatpush.msra.mxu0 0.0
  %847 = vmatpush.msra.mxu0 %v824
  %848 = vmatpush.msra.mxu0 %v822
  %849 = vmatpush.msra.mxu0 %v820
  %850 = vmatpush.msra.mxu0 %v818
  %851 = vmatpush.msra.mxu0 %v816
  %852 = vmatpush.msra.mxu0 %v814
  %853 = vmatpush.msra.mxu0 %v812
  %854 = vmatpush.msra.mxu0 %v810
  %855 = vmatmul.f32.gmra.mxu0 %v834
  %v856 = vpop.f32.mrf.mxu0
  %v857 = vadd.f32 %v829, %v856
  %858 = vmatmul.f32.gmra.mxu0 %v837
  %v859 = vpop.f32.mrf.mxu0
  %v860 = vadd.f32 %v829, %v859
  %861 = vdwg.mxu0
  %862 = vmatpush.msra.mxu0 0.0
  %863 = vmatpush.msra.mxu0 0.0
  %864 = vmatpush.msra.mxu0 0.0
  %865 = vmatpush.msra.mxu0 0.0
  %866 = vmatpush.msra.mxu0 0.0
  %867 = vmatpush.msra.mxu0 0.0
  %868 = vmatpush.msra.mxu0 0.0
  %869 = vmatpush.msra.mxu0 0.0
  %870 = vmatpush.msra.mxu0 %v825
  %871 = vmatpush.msra.mxu0 %v823
  %872 = vmatpush.msra.mxu0 %v821
  %873 = vmatpush.msra.mxu0 %v819
  %874 = vmatpush.msra.mxu0 %v817
  %875 = vmatpush.msra.mxu0 %v815
  %876 = vmatpush.msra.mxu0 %v813
  %877 = vmatpush.msra.mxu0 %v811
  %878 = vmatmul.f32.gmra.mxu0 %v834
  %v879 = vpop.f32.mrf.mxu0
  %v880 = vadd.f32 %v830, %v879
  %881 = vmatmul.f32.gmra.mxu0 %v837
  %v882 = vpop.f32.mrf.mxu0
  %v883 = vadd.f32 %v830, %v882
  %884 = vdwg.mxu0
  %v887 = vrot.slane %v857, 1
  %v888 = vrot.slane %v857, 2
  %v889 = vrot.slane %v857, 3
  %v890 = vrot.slane %v857, 4
  %v891 = vrot.slane %v857, 5
  %v892 = vrot.slane %v857, 6
  %v893 = vrot.slane %v857, 7
  %v894 = vrot.slane %v860, 1
  %v895 = vperm.slane %v857, 0
  %v896 = vperm.slane %v887, 0
  %v897 = vperm.slane %v888, 0
  %v898 = vperm.slane %v889, 0
  %v899 = vperm.slane %v890, 0
  %v900 = vperm.slane %v891, 0
  %v901 = vperm.slane %v892, 0
  %v902 = vperm.slane %v893, 0
  %v903 = vperm.slane %v860, 0
  %v904 = vperm.slane %v894, 0
  %915 = vrot.lane.b32.xlu0 %v857, 64
  %v916 = vpop.permute.xlu0 %915
  %917 = vrot.lane.b32.xlu0 %v860, 64
  %v918 = vpop.permute.xlu0 %917
  %v921 = vmul.f32 %v895, %v916
  %v922 = vmul.f32 %v895, %v918
  %v923 = vmul.f32 %v896, %v916
  %v924 = vmul.f32 %v896, %v918
  %v925 = vmul.f32 %v897, %v916
  %v926 = vmul.f32 %v897, %v918
  %v927 = vmul.f32 %v898, %v916
  %v928 = vmul.f32 %v898, %v918
  %v929 = vmul.f32 %v899, %v916
  %v930 = vmul.f32 %v899, %v918
  %v931 = vmul.f32 %v900, %v916
  %v932 = vmul.f32 %v900, %v918
  %v933 = vmul.f32 %v901, %v916
  %v934 = vmul.f32 %v901, %v918
  %v935 = vmul.f32 %v902, %v916
  %v936 = vmul.f32 %v902, %v918
  %v937 = vmul.f32 %v903, %v916
  %v938 = vmul.f32 %v903, %v918
  %v939 = vmul.f32 %v904, %v916
  %v940 = vmul.f32 %v904, %v918
  %v941 = vsel %vm45, %v921, -inf
  %v942 = vsel %vm155, %v922, -inf
  %v943 = vmax.f32 %v941, %v942
  %v944 = vrot.slane %v943, 4
  %v945 = vmax.f32 %v943, %v944
  %v946 = vrot.slane %v945, 2
  %v947 = vmax.f32 %v945, %v946
  %v948 = vrot.slane %v947, 1
  %v949 = vmax.f32 %v947, %v948
  %v950 = vsel %vm45, %v923, -inf
  %v951 = vsel %vm155, %v924, -inf
  %v952 = vmax.f32 %v950, %v951
  %v953 = vrot.slane %v952, 4
  %v954 = vmax.f32 %v952, %v953
  %v955 = vrot.slane %v954, 2
  %v956 = vmax.f32 %v954, %v955
  %v957 = vrot.slane %v956, 1
  %v958 = vmax.f32 %v956, %v957
  %v959 = vsel %vm45, %v925, -inf
  %v960 = vsel %vm155, %v926, -inf
  %v961 = vmax.f32 %v959, %v960
  %v962 = vrot.slane %v961, 4
  %v963 = vmax.f32 %v961, %v962
  %v964 = vrot.slane %v963, 2
  %v965 = vmax.f32 %v963, %v964
  %v966 = vrot.slane %v965, 1
  %v967 = vmax.f32 %v965, %v966
  %v968 = vsel %vm45, %v927, -inf
  %v969 = vsel %vm155, %v928, -inf
  %v970 = vmax.f32 %v968, %v969
  %v971 = vrot.slane %v970, 4
  %v972 = vmax.f32 %v970, %v971
  %v973 = vrot.slane %v972, 2
  %v974 = vmax.f32 %v972, %v973
  %v975 = vrot.slane %v974, 1
  %v976 = vmax.f32 %v974, %v975
  %v977 = vsel %vm45, %v929, -inf
  %v978 = vsel %vm155, %v930, -inf
  %v979 = vmax.f32 %v977, %v978
  %v980 = vrot.slane %v979, 4
  %v981 = vmax.f32 %v979, %v980
  %v982 = vrot.slane %v981, 2
  %v983 = vmax.f32 %v981, %v982
  %v984 = vrot.slane %v983, 1
  %v985 = vmax.f32 %v983, %v984
  %v986 = vsel %vm45, %v931, -inf
  %v987 = vsel %vm155, %v932, -inf
  %v988 = vmax.f32 %v986, %v987
  %v989 = vrot.slane %v988, 4
  %v990 = vmax.f32 %v988, %v989
  %v991 = vrot.slane %v990, 2
  %v992 = vmax.f32 %v990, %v991
  %v993 = vrot.slane %v992, 1
  %v994 = vmax.f32 %v992, %v993
  %v995 = vsel %vm45, %v933, -inf
  %v996 = vsel %vm155, %v934, -inf
  %v997 = vmax.f32 %v995, %v996
  %v998 = vrot.slane %v997, 4
  %v999 = vmax.f32 %v997, %v998
  %v1000 = vrot.slane %v999, 2
  %v1001 = vmax.f32 %v999, %v1000
  %v1002 = vrot.slane %v1001, 1
  %v1003 = vmax.f32 %v1001, %v1002
  %v1004 = vsel %vm45, %v935, -inf
  %v1005 = vsel %vm155, %v936, -inf
  %v1006 = vmax.f32 %v1004, %v1005
  %v1007 = vrot.slane %v1006, 4
  %v1008 = vmax.f32 %v1006, %v1007
  %v1009 = vrot.slane %v1008, 2
  %v1010 = vmax.f32 %v1008, %v1009
  %v1011 = vrot.slane %v1010, 1
  %v1012 = vmax.f32 %v1010, %v1011
  %v1013 = vsel %vm45, %v937, -inf
  %v1014 = vsel %vm155, %v938, -inf
  %v1015 = vmax.f32 %v1013, %v1014
  %v1016 = vrot.slane %v1015, 4
  %v1017 = vmax.f32 %v1015, %v1016
  %v1018 = vrot.slane %v1017, 2
  %v1019 = vmax.f32 %v1017, %v1018
  %v1020 = vrot.slane %v1019, 1
  %v1021 = vmax.f32 %v1019, %v1020
  %v1022 = vsel %vm45, %v939, -inf
  %v1023 = vsel %vm155, %v940, -inf
  %v1024 = vmax.f32 %v1022, %v1023
  %v1025 = vrot.slane %v1024, 4
  %v1026 = vmax.f32 %v1024, %v1025
  %v1027 = vrot.slane %v1026, 2
  %v1028 = vmax.f32 %v1026, %v1027
  %v1029 = vrot.slane %v1028, 1
  %v1030 = vmax.f32 %v1028, %v1029
  %v1031 = vsub.f32 %v921, %v949
  %v1032 = vsub.f32 %v922, %v949
  %v1033 = vsub.f32 %v923, %v958
  %v1034 = vsub.f32 %v924, %v958
  %v1035 = vsub.f32 %v925, %v967
  %v1036 = vsub.f32 %v926, %v967
  %v1037 = vsub.f32 %v927, %v976
  %v1038 = vsub.f32 %v928, %v976
  %v1039 = vsub.f32 %v929, %v985
  %v1040 = vsub.f32 %v930, %v985
  %v1041 = vsub.f32 %v931, %v994
  %v1042 = vsub.f32 %v932, %v994
  %v1043 = vsub.f32 %v933, %v1003
  %v1044 = vsub.f32 %v934, %v1003
  %v1045 = vsub.f32 %v935, %v1012
  %v1046 = vsub.f32 %v936, %v1012
  %v1047 = vsub.f32 %v937, %v1021
  %v1048 = vsub.f32 %v938, %v1021
  %v1049 = vsub.f32 %v939, %v1030
  %v1050 = vsub.f32 %v940, %v1030
  %v1051 = vmul.f32 %v1031, 1.442695
  %v1052 = vpow.pop %v1051
  %v1053 = vmul.f32 %v1032, 1.442695
  %v1054 = vpow.pop %v1053
  %v1055 = vmul.f32 %v1033, 1.442695
  %v1056 = vpow.pop %v1055
  %v1057 = vmul.f32 %v1034, 1.442695
  %v1058 = vpow.pop %v1057
  %v1059 = vmul.f32 %v1035, 1.442695
  %v1060 = vpow.pop %v1059
  %v1061 = vmul.f32 %v1036, 1.442695
  %v1062 = vpow.pop %v1061
  %v1063 = vmul.f32 %v1037, 1.442695
  %v1064 = vpow.pop %v1063
  %v1065 = vmul.f32 %v1038, 1.442695
  %v1066 = vpow.pop %v1065
  %v1067 = vmul.f32 %v1039, 1.442695
  %v1068 = vpow.pop %v1067
  %v1069 = vmul.f32 %v1040, 1.442695
  %v1070 = vpow.pop %v1069
  %v1071 = vmul.f32 %v1041, 1.442695
  %v1072 = vpow.pop %v1071
  %v1073 = vmul.f32 %v1042, 1.442695
  %v1074 = vpow.pop %v1073
  %v1075 = vmul.f32 %v1043, 1.442695
  %v1076 = vpow.pop %v1075
  %v1077 = vmul.f32 %v1044, 1.442695
  %v1078 = vpow.pop %v1077
  %v1079 = vmul.f32 %v1045, 1.442695
  %v1080 = vpow.pop %v1079
  %v1081 = vmul.f32 %v1046, 1.442695
  %v1082 = vpow.pop %v1081
  %v1083 = vmul.f32 %v1047, 1.442695
  %v1084 = vpow.pop %v1083
  %v1085 = vmul.f32 %v1048, 1.442695
  %v1086 = vpow.pop %v1085
  %v1087 = vmul.f32 %v1049, 1.442695
  %v1088 = vpow.pop %v1087
  %v1089 = vmul.f32 %v1050, 1.442695
  %v1090 = vpow.pop %v1089
  %v1091 = vsel %vm45, %v1052, 0.0
  %v1092 = vsel %vm155, %v1054, 0.0
  %v1093 = vadd.f32 %v1091, %v1092
  %v1094 = vrot.slane %v1093, 4
  %v1095 = vadd.f32 %v1093, %v1094
  %v1096 = vrot.slane %v1095, 2
  %v1097 = vadd.f32 %v1095, %v1096
  %v1098 = vrot.slane %v1097, 1
  %v1099 = vadd.f32 %v1097, %v1098
  %v1100 = vsel %vm45, %v1056, 0.0
  %v1101 = vsel %vm155, %v1058, 0.0
  %v1102 = vadd.f32 %v1100, %v1101
  %v1103 = vrot.slane %v1102, 4
  %v1104 = vadd.f32 %v1102, %v1103
  %v1105 = vrot.slane %v1104, 2
  %v1106 = vadd.f32 %v1104, %v1105
  %v1107 = vrot.slane %v1106, 1
  %v1108 = vadd.f32 %v1106, %v1107
  %v1109 = vsel %vm45, %v1060, 0.0
  %v1110 = vsel %vm155, %v1062, 0.0
  %v1111 = vadd.f32 %v1109, %v1110
  %v1112 = vrot.slane %v1111, 4
  %v1113 = vadd.f32 %v1111, %v1112
  %v1114 = vrot.slane %v1113, 2
  %v1115 = vadd.f32 %v1113, %v1114
  %v1116 = vrot.slane %v1115, 1
  %v1117 = vadd.f32 %v1115, %v1116
  %v1118 = vsel %vm45, %v1064, 0.0
  %v1119 = vsel %vm155, %v1066, 0.0
  %v1120 = vadd.f32 %v1118, %v1119
  %v1121 = vrot.slane %v1120, 4
  %v1122 = vadd.f32 %v1120, %v1121
  %v1123 = vrot.slane %v1122, 2
  %v1124 = vadd.f32 %v1122, %v1123
  %v1125 = vrot.slane %v1124, 1
  %v1126 = vadd.f32 %v1124, %v1125
  %v1127 = vsel %vm45, %v1068, 0.0
  %v1128 = vsel %vm155, %v1070, 0.0
  %v1129 = vadd.f32 %v1127, %v1128
  %v1130 = vrot.slane %v1129, 4
  %v1131 = vadd.f32 %v1129, %v1130
  %v1132 = vrot.slane %v1131, 2
  %v1133 = vadd.f32 %v1131, %v1132
  %v1134 = vrot.slane %v1133, 1
  %v1135 = vadd.f32 %v1133, %v1134
  %v1136 = vsel %vm45, %v1072, 0.0
  %v1137 = vsel %vm155, %v1074, 0.0
  %v1138 = vadd.f32 %v1136, %v1137
  %v1139 = vrot.slane %v1138, 4
  %v1140 = vadd.f32 %v1138, %v1139
  %v1141 = vrot.slane %v1140, 2
  %v1142 = vadd.f32 %v1140, %v1141
  %v1143 = vrot.slane %v1142, 1
  %v1144 = vadd.f32 %v1142, %v1143
  %v1145 = vsel %vm45, %v1076, 0.0
  %v1146 = vsel %vm155, %v1078, 0.0
  %v1147 = vadd.f32 %v1145, %v1146
  %v1148 = vrot.slane %v1147, 4
  %v1149 = vadd.f32 %v1147, %v1148
  %v1150 = vrot.slane %v1149, 2
  %v1151 = vadd.f32 %v1149, %v1150
  %v1152 = vrot.slane %v1151, 1
  %v1153 = vadd.f32 %v1151, %v1152
  %v1154 = vsel %vm45, %v1080, 0.0
  %v1155 = vsel %vm155, %v1082, 0.0
  %v1156 = vadd.f32 %v1154, %v1155
  %v1157 = vrot.slane %v1156, 4
  %v1158 = vadd.f32 %v1156, %v1157
  %v1159 = vrot.slane %v1158, 2
  %v1160 = vadd.f32 %v1158, %v1159
  %v1161 = vrot.slane %v1160, 1
  %v1162 = vadd.f32 %v1160, %v1161
  %v1163 = vsel %vm45, %v1084, 0.0
  %v1164 = vsel %vm155, %v1086, 0.0
  %v1165 = vadd.f32 %v1163, %v1164
  %v1166 = vrot.slane %v1165, 4
  %v1167 = vadd.f32 %v1165, %v1166
  %v1168 = vrot.slane %v1167, 2
  %v1169 = vadd.f32 %v1167, %v1168
  %v1170 = vrot.slane %v1169, 1
  %v1171 = vadd.f32 %v1169, %v1170
  %v1172 = vsel %vm45, %v1088, 0.0
  %v1173 = vsel %vm155, %v1090, 0.0
  %v1174 = vadd.f32 %v1172, %v1173
  %v1175 = vrot.slane %v1174, 4
  %v1176 = vadd.f32 %v1174, %v1175
  %v1177 = vrot.slane %v1176, 2
  %v1178 = vadd.f32 %v1176, %v1177
  %v1179 = vrot.slane %v1178, 1
  %v1180 = vadd.f32 %v1178, %v1179
  %v1181 = vrcp.pop %v1099
  %v1182 = vmul.f32 %v1099, %v1181
  %v1183 = vsub.f32 1.0, %v1182
  %v1184 = vmul.f32 %v1181, %v1183
  %v1185 = vadd.f32 %v1181, %v1184
  %vm1186 = vweird.f32 %v1099
  %vm1187 = vweird.f32 %v1181
  %vm1188 = vmor %vm1186, %vm1187
  %v1189 = vsel %vm1188, %v1181, %v1185
  %v1190 = vand.u32 2147483647, %v1099
  %vm1191 = vcmp.eq.f32.partialorder %v1190, 8.507059e+37
  %v1192 = vand.u32 %v1099, 2147483648
  %v1193 = vor.u32 1.1754944e-38, %v1192
  %v1194 = vsel %vm1191, %v1193, %v1189
  %v1195 = vmul.f32 %v1052, %v1194
  %v1196 = vmul.f32 %v1054, %v1194
  %v1197 = vrcp.pop %v1108
  %v1198 = vmul.f32 %v1108, %v1197
  %v1199 = vsub.f32 1.0, %v1198
  %v1200 = vmul.f32 %v1197, %v1199
  %v1201 = vadd.f32 %v1197, %v1200
  %vm1202 = vweird.f32 %v1108
  %vm1203 = vweird.f32 %v1197
  %vm1204 = vmor %vm1202, %vm1203
  %v1205 = vsel %vm1204, %v1197, %v1201
  %v1206 = vand.u32 2147483647, %v1108
  %vm1207 = vcmp.eq.f32.partialorder %v1206, 8.507059e+37
  %v1208 = vand.u32 %v1108, 2147483648
  %v1209 = vor.u32 1.1754944e-38, %v1208
  %v1210 = vsel %vm1207, %v1209, %v1205
  %v1211 = vmul.f32 %v1056, %v1210
  %v1212 = vmul.f32 %v1058, %v1210
  %v1213 = vrcp.pop %v1117
  %v1214 = vmul.f32 %v1117, %v1213
  %v1215 = vsub.f32 1.0, %v1214
  %v1216 = vmul.f32 %v1213, %v1215
  %v1217 = vadd.f32 %v1213, %v1216
  %vm1218 = vweird.f32 %v1117
  %vm1219 = vweird.f32 %v1213
  %vm1220 = vmor %vm1218, %vm1219
  %v1221 = vsel %vm1220, %v1213, %v1217
  %v1222 = vand.u32 2147483647, %v1117
  %vm1223 = vcmp.eq.f32.partialorder %v1222, 8.507059e+37
  %v1224 = vand.u32 %v1117, 2147483648
  %v1225 = vor.u32 1.1754944e-38, %v1224
  %v1226 = vsel %vm1223, %v1225, %v1221
  %v1227 = vmul.f32 %v1060, %v1226
  %v1228 = vmul.f32 %v1062, %v1226
  %v1229 = vrcp.pop %v1126
  %v1230 = vmul.f32 %v1126, %v1229
  %v1231 = vsub.f32 1.0, %v1230
  %v1232 = vmul.f32 %v1229, %v1231
  %v1233 = vadd.f32 %v1229, %v1232
  %vm1234 = vweird.f32 %v1126
  %vm1235 = vweird.f32 %v1229
  %vm1236 = vmor %vm1234, %vm1235
  %v1237 = vsel %vm1236, %v1229, %v1233
  %v1238 = vand.u32 2147483647, %v1126
  %vm1239 = vcmp.eq.f32.partialorder %v1238, 8.507059e+37
  %v1240 = vand.u32 %v1126, 2147483648
  %v1241 = vor.u32 1.1754944e-38, %v1240
  %v1242 = vsel %vm1239, %v1241, %v1237
  %v1243 = vmul.f32 %v1064, %v1242
  %v1244 = vmul.f32 %v1066, %v1242
  %v1245 = vrcp.pop %v1135
  %v1246 = vmul.f32 %v1135, %v1245
  %v1247 = vsub.f32 1.0, %v1246
  %v1248 = vmul.f32 %v1245, %v1247
  %v1249 = vadd.f32 %v1245, %v1248
  %vm1250 = vweird.f32 %v1135
  %vm1251 = vweird.f32 %v1245
  %vm1252 = vmor %vm1250, %vm1251
  %v1253 = vsel %vm1252, %v1245, %v1249
  %v1254 = vand.u32 2147483647, %v1135
  %vm1255 = vcmp.eq.f32.partialorder %v1254, 8.507059e+37
  %v1256 = vand.u32 %v1135, 2147483648
  %v1257 = vor.u32 1.1754944e-38, %v1256
  %v1258 = vsel %vm1255, %v1257, %v1253
  %v1259 = vmul.f32 %v1068, %v1258
  %v1260 = vmul.f32 %v1070, %v1258
  %v1261 = vrcp.pop %v1144
  %v1262 = vmul.f32 %v1144, %v1261
  %v1263 = vsub.f32 1.0, %v1262
  %v1264 = vmul.f32 %v1261, %v1263
  %v1265 = vadd.f32 %v1261, %v1264
  %vm1266 = vweird.f32 %v1144
  %vm1267 = vweird.f32 %v1261
  %vm1268 = vmor %vm1266, %vm1267
  %v1269 = vsel %vm1268, %v1261, %v1265
  %v1270 = vand.u32 2147483647, %v1144
  %vm1271 = vcmp.eq.f32.partialorder %v1270, 8.507059e+37
  %v1272 = vand.u32 %v1144, 2147483648
  %v1273 = vor.u32 1.1754944e-38, %v1272
  %v1274 = vsel %vm1271, %v1273, %v1269
  %v1275 = vmul.f32 %v1072, %v1274
  %v1276 = vmul.f32 %v1074, %v1274
  %v1277 = vrcp.pop %v1153
  %v1278 = vmul.f32 %v1153, %v1277
  %v1279 = vsub.f32 1.0, %v1278
  %v1280 = vmul.f32 %v1277, %v1279
  %v1281 = vadd.f32 %v1277, %v1280
  %vm1282 = vweird.f32 %v1153
  %vm1283 = vweird.f32 %v1277
  %vm1284 = vmor %vm1282, %vm1283
  %v1285 = vsel %vm1284, %v1277, %v1281
  %v1286 = vand.u32 2147483647, %v1153
  %vm1287 = vcmp.eq.f32.partialorder %v1286, 8.507059e+37
  %v1288 = vand.u32 %v1153, 2147483648
  %v1289 = vor.u32 1.1754944e-38, %v1288
  %v1290 = vsel %vm1287, %v1289, %v1285
  %v1291 = vmul.f32 %v1076, %v1290
  %v1292 = vmul.f32 %v1078, %v1290
  %v1293 = vrcp.pop %v1162
  %v1294 = vmul.f32 %v1162, %v1293
  %v1295 = vsub.f32 1.0, %v1294
  %v1296 = vmul.f32 %v1293, %v1295
  %v1297 = vadd.f32 %v1293, %v1296
  %vm1298 = vweird.f32 %v1162
  %vm1299 = vweird.f32 %v1293
  %vm1300 = vmor %vm1298, %vm1299
  %v1301 = vsel %vm1300, %v1293, %v1297
  %v1302 = vand.u32 2147483647, %v1162
  %vm1303 = vcmp.eq.f32.partialorder %v1302, 8.507059e+37
  %v1304 = vand.u32 %v1162, 2147483648
  %v1305 = vor.u32 1.1754944e-38, %v1304
  %v1306 = vsel %vm1303, %v1305, %v1301
  %v1307 = vmul.f32 %v1080, %v1306
  %v1308 = vmul.f32 %v1082, %v1306
  %v1309 = vrcp.pop %v1171
  %v1310 = vmul.f32 %v1171, %v1309
  %v1311 = vsub.f32 1.0, %v1310
  %v1312 = vmul.f32 %v1309, %v1311
  %v1313 = vadd.f32 %v1309, %v1312
  %vm1314 = vweird.f32 %v1171
  %vm1315 = vweird.f32 %v1309
  %vm1316 = vmor %vm1314, %vm1315
  %v1317 = vsel %vm1316, %v1309, %v1313
  %v1318 = vand.u32 2147483647, %v1171
  %vm1319 = vcmp.eq.f32.partialorder %v1318, 8.507059e+37
  %v1320 = vand.u32 %v1171, 2147483648
  %v1321 = vor.u32 1.1754944e-38, %v1320
  %v1322 = vsel %vm1319, %v1321, %v1317
  %v1323 = vmul.f32 %v1084, %v1322
  %v1324 = vmul.f32 %v1086, %v1322
  %v1325 = vrcp.pop %v1180
  %v1326 = vmul.f32 %v1180, %v1325
  %v1327 = vsub.f32 1.0, %v1326
  %v1328 = vmul.f32 %v1325, %v1327
  %v1329 = vadd.f32 %v1325, %v1328
  %vm1330 = vweird.f32 %v1180
  %vm1331 = vweird.f32 %v1325
  %vm1332 = vmor %vm1330, %vm1331
  %v1333 = vsel %vm1332, %v1325, %v1329
  %v1334 = vand.u32 2147483647, %v1180
  %vm1335 = vcmp.eq.f32.partialorder %v1334, 8.507059e+37
  %v1336 = vand.u32 %v1180, 2147483648
  %v1337 = vor.u32 1.1754944e-38, %v1336
  %v1338 = vsel %vm1335, %v1337, %v1333
  %v1339 = vmul.f32 %v1088, %v1338
  %v1340 = vmul.f32 %v1090, %v1338
  %v1341 = vmul.f32 %v1195, %v880
  %v1342 = vmul.f32 %v1196, %v883
  %v1343 = vmul.f32 %v1211, %v880
  %v1344 = vmul.f32 %v1212, %v883
  %v1345 = vmul.f32 %v1227, %v880
  %v1346 = vmul.f32 %v1228, %v883
  %v1347 = vmul.f32 %v1243, %v880
  %v1348 = vmul.f32 %v1244, %v883
  %v1349 = vmul.f32 %v1259, %v880
  %v1350 = vmul.f32 %v1260, %v883
  %v1351 = vmul.f32 %v1275, %v880
  %v1352 = vmul.f32 %v1276, %v883
  %v1353 = vmul.f32 %v1291, %v880
  %v1354 = vmul.f32 %v1292, %v883
  %v1355 = vmul.f32 %v1307, %v880
  %v1356 = vmul.f32 %v1308, %v883
  %v1357 = vmul.f32 %v1323, %v880
  %v1358 = vmul.f32 %v1324, %v883
  %v1359 = vmul.f32 %v1339, %v880
  %v1360 = vmul.f32 %v1340, %v883
  %v1361 = vsel %vm45, %v1341, 0.0
  %v1362 = vsel %vm155, %v1342, 0.0
  %v1363 = vadd.f32 %v1361, %v1362
  %v1364 = vrot.slane %v1363, 4
  %v1365 = vadd.f32 %v1363, %v1364
  %v1366 = vrot.slane %v1365, 2
  %v1367 = vadd.f32 %v1365, %v1366
  %v1368 = vrot.slane %v1367, 1
  %v1369 = vadd.f32 %v1367, %v1368
  %v1370 = vsel %vm45, %v1343, 0.0
  %v1371 = vsel %vm155, %v1344, 0.0
  %v1372 = vadd.f32 %v1370, %v1371
  %v1373 = vrot.slane %v1372, 4
  %v1374 = vadd.f32 %v1372, %v1373
  %v1375 = vrot.slane %v1374, 2
  %v1376 = vadd.f32 %v1374, %v1375
  %v1377 = vrot.slane %v1376, 1
  %v1378 = vadd.f32 %v1376, %v1377
  %v1379 = vsel %vm45, %v1345, 0.0
  %v1380 = vsel %vm155, %v1346, 0.0
  %v1381 = vadd.f32 %v1379, %v1380
  %v1382 = vrot.slane %v1381, 4
  %v1383 = vadd.f32 %v1381, %v1382
  %v1384 = vrot.slane %v1383, 2
  %v1385 = vadd.f32 %v1383, %v1384
  %v1386 = vrot.slane %v1385, 1
  %v1387 = vadd.f32 %v1385, %v1386
  %v1388 = vsel %vm45, %v1347, 0.0
  %v1389 = vsel %vm155, %v1348, 0.0
  %v1390 = vadd.f32 %v1388, %v1389
  %v1391 = vrot.slane %v1390, 4
  %v1392 = vadd.f32 %v1390, %v1391
  %v1393 = vrot.slane %v1392, 2
  %v1394 = vadd.f32 %v1392, %v1393
  %v1395 = vrot.slane %v1394, 1
  %v1396 = vadd.f32 %v1394, %v1395
  %v1397 = vsel %vm45, %v1349, 0.0
  %v1398 = vsel %vm155, %v1350, 0.0
  %v1399 = vadd.f32 %v1397, %v1398
  %v1400 = vrot.slane %v1399, 4
  %v1401 = vadd.f32 %v1399, %v1400
  %v1402 = vrot.slane %v1401, 2
  %v1403 = vadd.f32 %v1401, %v1402
  %v1404 = vrot.slane %v1403, 1
  %v1405 = vadd.f32 %v1403, %v1404
  %v1406 = vsel %vm45, %v1351, 0.0
  %v1407 = vsel %vm155, %v1352, 0.0
  %v1408 = vadd.f32 %v1406, %v1407
  %v1409 = vrot.slane %v1408, 4
  %v1410 = vadd.f32 %v1408, %v1409
  %v1411 = vrot.slane %v1410, 2
  %v1412 = vadd.f32 %v1410, %v1411
  %v1413 = vrot.slane %v1412, 1
  %v1414 = vadd.f32 %v1412, %v1413
  %v1415 = vsel %vm45, %v1353, 0.0
  %v1416 = vsel %vm155, %v1354, 0.0
  %v1417 = vadd.f32 %v1415, %v1416
  %v1418 = vrot.slane %v1417, 4
  %v1419 = vadd.f32 %v1417, %v1418
  %v1420 = vrot.slane %v1419, 2
  %v1421 = vadd.f32 %v1419, %v1420
  %v1422 = vrot.slane %v1421, 1
  %v1423 = vadd.f32 %v1421, %v1422
  %v1424 = vsel %vm45, %v1355, 0.0
  %v1425 = vsel %vm155, %v1356, 0.0
  %v1426 = vadd.f32 %v1424, %v1425
  %v1427 = vrot.slane %v1426, 4
  %v1428 = vadd.f32 %v1426, %v1427
  %v1429 = vrot.slane %v1428, 2
  %v1430 = vadd.f32 %v1428, %v1429
  %v1431 = vrot.slane %v1430, 1
  %v1432 = vadd.f32 %v1430, %v1431
  %v1433 = vsel %vm45, %v1357, 0.0
  %v1434 = vsel %vm155, %v1358, 0.0
  %v1435 = vadd.f32 %v1433, %v1434
  %v1436 = vrot.slane %v1435, 4
  %v1437 = vadd.f32 %v1435, %v1436
  %v1438 = vrot.slane %v1437, 2
  %v1439 = vadd.f32 %v1437, %v1438
  %v1440 = vrot.slane %v1439, 1
  %v1441 = vadd.f32 %v1439, %v1440
  %v1442 = vsel %vm45, %v1359, 0.0
  %v1443 = vsel %vm155, %v1360, 0.0
  %v1444 = vadd.f32 %v1442, %v1443
  %v1445 = vrot.slane %v1444, 4
  %v1446 = vadd.f32 %v1444, %v1445
  %v1447 = vrot.slane %v1446, 2
  %v1448 = vadd.f32 %v1446, %v1447
  %v1449 = vrot.slane %v1448, 1
  %v1450 = vadd.f32 %v1448, %v1449
  %v1451 = vld [vmem:[%s2 + $0x1d0] sm:$0xff]
  %v1452 = vld [vmem:[%s2 + $0x1e0] sm:$0xff]
  %v1453 = vld [vmem:[%s2 + $0x1f0] sm:$0xff]
  %v1454 = vld [vmem:[%s2 + $0x200] sm:$0xff]
  %v1455 = vld [vmem:[%s2 + $0x210] sm:$0xff]
  %v1456 = vld [vmem:[%s2 + $0x220] sm:$0xff]
  %v1457 = vld [vmem:[%s2 + $0x230] sm:$0xff]
  %v1458 = vld [vmem:[%s2 + $0x240] sm:$0xff]
  %v1459 = vld [vmem:[%s2 + $0x250] ss:$0 sm:$0xff]
  %v1470 = vsel %vm684, %v1378, %v1369
  %v1471 = vsel %vm686, %v1387, %v1470
  %v1472 = vsel %vm688, %v1396, %v1471
  %v1473 = vsel %vm690, %v1405, %v1472
  %v1474 = vsel %vm692, %v1414, %v1473
  %v1475 = vsel %vm694, %v1423, %v1474
  %v1476 = vsel %vm696, %v1432, %v1475
  %v1477 = vsel %vm684, %v1450, %v1441
  %v1478 = vsel %vm45, %v1476, 0
  %v1480 = vsel %vm45, %v1477, 0
  %1482 = vmatpush.msra.mxu0 0.0
  %1483 = vmatpush.msra.mxu0 0.0
  %1484 = vmatpush.msra.mxu0 0.0
  %1485 = vmatpush.msra.mxu0 0.0
  %1486 = vmatpush.msra.mxu0 0.0
  %1487 = vmatpush.msra.mxu0 0.0
  %1488 = vmatpush.msra.mxu0 0.0
  %1489 = vmatpush.msra.mxu0 0.0
  %1490 = vmatpush.msra.mxu0 %v1458
  %1491 = vmatpush.msra.mxu0 %v1457
  %1492 = vmatpush.msra.mxu0 %v1456
  %1493 = vmatpush.msra.mxu0 %v1455
  %1494 = vmatpush.msra.mxu0 %v1454
  %1495 = vmatpush.msra.mxu0 %v1453
  %1496 = vmatpush.msra.mxu0 %v1452
  %1497 = vmatpush.msra.mxu0 %v1451
  %1498 = vmatmul.f32.gmra.mxu0 %v1478
  %v1499 = vpop.f32.mrf.mxu0
  %v1500 = vadd.f32 %v1459, %v1499
  %1501 = vmatmul.f32.gmra.mxu0 %v1480
  %v1502 = vpop.f32.mrf.mxu0
  %v1503 = vadd.f32 %v1459, %v1502
  %1504 = vdwg.mxu0
  %v1505 = vadd.f32 %v808, %v1500
  %v1506 = vadd.f32 %v809, %v1503
  %v1507 = vld [vmem:[%s2 + $0x260] sm:$0xff]
  %v1508 = vld [vmem:[%s2 + $0x268] sm:$0xff]
  %v1509 = vld [vmem:[%s2 + $0x270] sm:$0xff]
  %v1510 = vld [vmem:[%s2 + $0x278] sm:$0xff]
  %v1511 = vld [vmem:[%s2 + $0x280] sm:$0xff]
  %v1512 = vld [vmem:[%s2 + $0x288] sm:$0xff]
  %v1513 = vld [vmem:[%s2 + $0x290] sm:$0xff]
  %v1514 = vld [vmem:[%s2 + $0x298] sm:$0xff]
  %v1515 = vld [vmem:[%s2 + $0x2a0] sm:$0xff]
  %v1516 = vld [vmem:[%s2 + $0x2a8] sm:$0xff]
  %v1517 = vld [vmem:[%s2 + $0x2b0] sm:$0xff]
  %v1518 = vld [vmem:[%s2 + $0x2b8] sm:$0xff]
  %v1519 = vld [vmem:[%s2 + $0x2c0] sm:$0xff]
  %v1520 = vld [vmem:[%s2 + $0x2c8] sm:$0xff]
  %v1521 = vld [vmem:[%s2 + $0x2d0] sm:$0xff]
  %v1522 = vld [vmem:[%s2 + $0x2d8] sm:$0xff]
  %s1523 = scalar_lea.vmem %s2, 736
  %v1524 = vld [vmem:[%s1523] ss:$8 sm:$0x3]
  %v1526 = vperm.slane %v1524, 0
  %v1527 = vperm.slane %v1524, 1
  %v1531 = vsel %vm45, %v1505, 0
  %v1534 = vsel %vm45, %v1506, 0
  %1536 = vmatpush.msra.mxu0 0.0
  %1537 = vmatpush.msra.mxu0 0.0
  %1538 = vmatpush.msra.mxu0 0.0
  %1539 = vmatpush.msra.mxu0 0.0
  %1540 = vmatpush.msra.mxu0 0.0
  %1541 = vmatpush.msra.mxu0 0.0
  %1542 = vmatpush.msra.mxu0 0.0
  %1543 = vmatpush.msra.mxu0 0.0
  %1544 = vmatpush.msra.mxu0 %v1521
  %1545 = vmatpush.msra.mxu0 %v1519
  %1546 = vmatpush.msra.mxu0 %v1517
  %1547 = vmatpush.msra.mxu0 %v1515
  %1548 = vmatpush.msra.mxu0 %v1513
  %1549 = vmatpush.msra.mxu0 %v1511
  %1550 = vmatpush.msra.mxu0 %v1509
  %1551 = vmatpush.msra.mxu0 %v1507
  %1552 = vmatmul.f32.gmra.mxu0 %v1531
  %v1553 = vpop.f32.mrf.mxu0
  %v1554 = vadd.f32 %v1526, %v1553
  %1555 = vmatmul.f32.gmra.mxu0 %v1534
  %v1556 = vpop.f32.mrf.mxu0
  %v1557 = vadd.f32 %v1526, %v1556
  %1558 = vdwg.mxu0
  %v1560 = vsel %vm45, %v806, 0
  %v1563 = vsel %vm45, %v807, 0
  %1565 = vmatpush.msra.mxu0 0.0
  %1566 = vmatpush.msra.mxu0 0.0
  %1567 = vmatpush.msra.mxu0 0.0
  %1568 = vmatpush.msra.mxu0 0.0
  %1569 = vmatpush.msra.mxu0 0.0
  %1570 = vmatpush.msra.mxu0 0.0
  %1571 = vmatpush.msra.mxu0 0.0
  %1572 = vmatpush.msra.mxu0 0.0
  %1573 = vmatpush.msra.mxu0 %v1521
  %1574 = vmatpush.msra.mxu0 %v1519
  %1575 = vmatpush.msra.mxu0 %v1517
  %1576 = vmatpush.msra.mxu0 %v1515
  %1577 = vmatpush.msra.mxu0 %v1513
  %1578 = vmatpush.msra.mxu0 %v1511
  %1579 = vmatpush.msra.mxu0 %v1509
  %1580 = vmatpush.msra.mxu0 %v1507
  %1581 = vmatmul.f32.gmra.mxu0 %v1560
  %v1582 = vpop.f32.mrf.mxu0
  %v1583 = vadd.f32 %v1526, %v1582
  %1584 = vmatmul.f32.gmra.mxu0 %v1563
  %v1585 = vpop.f32.mrf.mxu0
  %v1586 = vadd.f32 %v1526, %v1585
  %1587 = vdwg.mxu0
  %1588 = vmatpush.msra.mxu0 0.0
  %1589 = vmatpush.msra.mxu0 0.0
  %1590 = vmatpush.msra.mxu0 0.0
  %1591 = vmatpush.msra.mxu0 0.0
  %1592 = vmatpush.msra.mxu0 0.0
  %1593 = vmatpush.msra.mxu0 0.0
  %1594 = vmatpush.msra.mxu0 0.0
  %1595 = vmatpush.msra.mxu0 0.0
  %1596 = vmatpush.msra.mxu0 %v1522
  %1597 = vmatpush.msra.mxu0 %v1520
  %1598 = vmatpush.msra.mxu0 %v1518
  %1599 = vmatpush.msra.mxu0 %v1516
  %1600 = vmatpush.msra.mxu0 %v1514
  %1601 = vmatpush.msra.mxu0 %v1512
  %1602 = vmatpush.msra.mxu0 %v1510
  %1603 = vmatpush.msra.mxu0 %v1508
  %1604 = vmatmul.f32.gmra.mxu0 %v1560
  %v1605 = vpop.f32.mrf.mxu0
  %v1606 = vadd.f32 %v1527, %v1605
  %1607 = vmatmul.f32.gmra.mxu0 %v1563
  %v1608 = vpop.f32.mrf.mxu0
  %v1609 = vadd.f32 %v1527, %v1608
  %1610 = vdwg.mxu0
  %v1613 = vrot.slane %v1554, 1
  %v1614 = vrot.slane %v1554, 2
  %v1615 = vrot.slane %v1554, 3
  %v1616 = vrot.slane %v1554, 4
  %v1617 = vrot.slane %v1554, 5
  %v1618 = vrot.slane %v1554, 6
  %v1619 = vrot.slane %v1554, 7
  %v1620 = vrot.slane %v1557, 1
  %v1621 = vperm.slane %v1554, 0
  %v1622 = vperm.slane %v1613, 0
  %v1623 = vperm.slane %v1614, 0
  %v1624 = vperm.slane %v1615, 0
  %v1625 = vperm.slane %v1616, 0
  %v1626 = vperm.slane %v1617, 0
  %v1627 = vperm.slane %v1618, 0
  %v1628 = vperm.slane %v1619, 0
  %v1629 = vperm.slane %v1557, 0
  %v1630 = vperm.slane %v1620, 0
  %1643 = vrot.lane.b32.xlu0 %v1583, 64
  %v1644 = vpop.permute.xlu0 %1643
  %1645 = vrot.lane.b32.xlu0 %v1586, 64
  %v1646 = vpop.permute.xlu0 %1645
  %v1649 = vmul.f32 %v1621, %v1644
  %v1650 = vmul.f32 %v1621, %v1646
  %v1651 = vmul.f32 %v1622, %v1644
  %v1652 = vmul.f32 %v1622, %v1646
  %v1653 = vmul.f32 %v1623, %v1644
  %v1654 = vmul.f32 %v1623, %v1646
  %v1655 = vmul.f32 %v1624, %v1644
  %v1656 = vmul.f32 %v1624, %v1646
  %v1657 = vmul.f32 %v1625, %v1644
  %v1658 = vmul.f32 %v1625, %v1646
  %v1659 = vmul.f32 %v1626, %v1644
  %v1660 = vmul.f32 %v1626, %v1646
  %v1661 = vmul.f32 %v1627, %v1644
  %v1662 = vmul.f32 %v1627, %v1646
  %v1663 = vmul.f32 %v1628, %v1644
  %v1664 = vmul.f32 %v1628, %v1646
  %v1665 = vmul.f32 %v1629, %v1644
  %v1666 = vmul.f32 %v1629, %v1646
  %v1667 = vmul.f32 %v1630, %v1644
  %v1668 = vmul.f32 %v1630, %v1646
  %v1669 = vsel %vm45, %v1649, -inf
  %v1670 = vsel %vm155, %v1650, -inf
  %v1671 = vmax.f32 %v1669, %v1670
  %v1672 = vrot.slane %v1671, 4
  %v1673 = vmax.f32 %v1671, %v1672
  %v1674 = vrot.slane %v1673, 2
  %v1675 = vmax.f32 %v1673, %v1674
  %v1676 = vrot.slane %v1675, 1
  %v1677 = vmax.f32 %v1675, %v1676
  %v1678 = vsel %vm45, %v1651, -inf
  %v1679 = vsel %vm155, %v1652, -inf
  %v1680 = vmax.f32 %v1678, %v1679
  %v1681 = vrot.slane %v1680, 4
  %v1682 = vmax.f32 %v1680, %v1681
  %v1683 = vrot.slane %v1682, 2
  %v1684 = vmax.f32 %v1682, %v1683
  %v1685 = vrot.slane %v1684, 1
  %v1686 = vmax.f32 %v1684, %v1685
  %v1687 = vsel %vm45, %v1653, -inf
  %v1688 = vsel %vm155, %v1654, -inf
  %v1689 = vmax.f32 %v1687, %v1688
  %v1690 = vrot.slane %v1689, 4
  %v1691 = vmax.f32 %v1689, %v1690
  %v1692 = vrot.slane %v1691, 2
  %v1693 = vmax.f32 %v1691, %v1692
  %v1694 = vrot.slane %v1693, 1
  %v1695 = vmax.f32 %v1693, %v1694
  %v1696 = vsel %vm45, %v1655, -inf
  %v1697 = vsel %vm155, %v1656, -inf
  %v1698 = vmax.f32 %v1696, %v1697
  %v1699 = vrot.slane %v1698, 4
  %v1700 = vmax.f32 %v1698, %v1699
  %v1701 = vrot.slane %v1700, 2
  %v1702 = vmax.f32 %v1700, %v1701
  %v1703 = vrot.slane %v1702, 1
  %v1704 = vmax.f32 %v1702, %v1703
  %v1705 = vsel %vm45, %v1657, -inf
  %v1706 = vsel %vm155, %v1658, -inf
  %v1707 = vmax.f32 %v1705, %v1706
  %v1708 = vrot.slane %v1707, 4
  %v1709 = vmax.f32 %v1707, %v1708
  %v1710 = vrot.slane %v1709, 2
  %v1711 = vmax.f32 %v1709, %v1710
  %v1712 = vrot.slane %v1711, 1
  %v1713 = vmax.f32 %v1711, %v1712
  %v1714 = vsel %vm45, %v1659, -inf
  %v1715 = vsel %vm155, %v1660, -inf
  %v1716 = vmax.f32 %v1714, %v1715
  %v1717 = vrot.slane %v1716, 4
  %v1718 = vmax.f32 %v1716, %v1717
  %v1719 = vrot.slane %v1718, 2
  %v1720 = vmax.f32 %v1718, %v1719
  %v1721 = vrot.slane %v1720, 1
  %v1722 = vmax.f32 %v1720, %v1721
  %v1723 = vsel %vm45, %v1661, -inf
  %v1724 = vsel %vm155, %v1662, -inf
  %v1725 = vmax.f32 %v1723, %v1724
  %v1726 = vrot.slane %v1725, 4
  %v1727 = vmax.f32 %v1725, %v1726
  %v1728 = vrot.slane %v1727, 2
  %v1729 = vmax.f32 %v1727, %v1728
  %v1730 = vrot.slane %v1729, 1
  %v1731 = vmax.f32 %v1729, %v1730
  %v1732 = vsel %vm45, %v1663, -inf
  %v1733 = vsel %vm155, %v1664, -inf
  %v1734 = vmax.f32 %v1732, %v1733
  %v1735 = vrot.slane %v1734, 4
  %v1736 = vmax.f32 %v1734, %v1735
  %v1737 = vrot.slane %v1736, 2
  %v1738 = vmax.f32 %v1736, %v1737
  %v1739 = vrot.slane %v1738, 1
  %v1740 = vmax.f32 %v1738, %v1739
  %v1741 = vsel %vm45, %v1665, -inf
  %v1742 = vsel %vm155, %v1666, -inf
  %v1743 = vmax.f32 %v1741, %v1742
  %v1744 = vrot.slane %v1743, 4
  %v1745 = vmax.f32 %v1743, %v1744
  %v1746 = vrot.slane %v1745, 2
  %v1747 = vmax.f32 %v1745, %v1746
  %v1748 = vrot.slane %v1747, 1
  %v1749 = vmax.f32 %v1747, %v1748
  %v1750 = vsel %vm45, %v1667, -inf
  %v1751 = vsel %vm155, %v1668, -inf
  %v1752 = vmax.f32 %v1750, %v1751
  %v1753 = vrot.slane %v1752, 4
  %v1754 = vmax.f32 %v1752, %v1753
  %v1755 = vrot.slane %v1754, 2
  %v1756 = vmax.f32 %v1754, %v1755
  %v1757 = vrot.slane %v1756, 1
  %v1758 = vmax.f32 %v1756, %v1757
  %v1759 = vsub.f32 %v1649, %v1677
  %v1760 = vsub.f32 %v1650, %v1677
  %v1761 = vsub.f32 %v1651, %v1686
  %v1762 = vsub.f32 %v1652, %v1686
  %v1763 = vsub.f32 %v1653, %v1695
  %v1764 = vsub.f32 %v1654, %v1695
  %v1765 = vsub.f32 %v1655, %v1704
  %v1766 = vsub.f32 %v1656, %v1704
  %v1767 = vsub.f32 %v1657, %v1713
  %v1768 = vsub.f32 %v1658, %v1713
  %v1769 = vsub.f32 %v1659, %v1722
  %v1770 = vsub.f32 %v1660, %v1722
  %v1771 = vsub.f32 %v1661, %v1731
  %v1772 = vsub.f32 %v1662, %v1731
  %v1773 = vsub.f32 %v1663, %v1740
  %v1774 = vsub.f32 %v1664, %v1740
  %v1775 = vsub.f32 %v1665, %v1749
  %v1776 = vsub.f32 %v1666, %v1749
  %v1777 = vsub.f32 %v1667, %v1758
  %v1778 = vsub.f32 %v1668, %v1758
  %v1779 = vmul.f32 %v1759, 1.442695
  %v1780 = vpow.pop %v1779
  %v1781 = vmul.f32 %v1760, 1.442695
  %v1782 = vpow.pop %v1781
  %v1783 = vmul.f32 %v1761, 1.442695
  %v1784 = vpow.pop %v1783
  %v1785 = vmul.f32 %v1762, 1.442695
  %v1786 = vpow.pop %v1785
  %v1787 = vmul.f32 %v1763, 1.442695
  %v1788 = vpow.pop %v1787
  %v1789 = vmul.f32 %v1764, 1.442695
  %v1790 = vpow.pop %v1789
  %v1791 = vmul.f32 %v1765, 1.442695
  %v1792 = vpow.pop %v1791
  %v1793 = vmul.f32 %v1766, 1.442695
  %v1794 = vpow.pop %v1793
  %v1795 = vmul.f32 %v1767, 1.442695
  %v1796 = vpow.pop %v1795
  %v1797 = vmul.f32 %v1768, 1.442695
  %v1798 = vpow.pop %v1797
  %v1799 = vmul.f32 %v1769, 1.442695
  %v1800 = vpow.pop %v1799
  %v1801 = vmul.f32 %v1770, 1.442695
  %v1802 = vpow.pop %v1801
  %v1803 = vmul.f32 %v1771, 1.442695
  %v1804 = vpow.pop %v1803
  %v1805 = vmul.f32 %v1772, 1.442695
  %v1806 = vpow.pop %v1805
  %v1807 = vmul.f32 %v1773, 1.442695
  %v1808 = vpow.pop %v1807
  %v1809 = vmul.f32 %v1774, 1.442695
  %v1810 = vpow.pop %v1809
  %v1811 = vmul.f32 %v1775, 1.442695
  %v1812 = vpow.pop %v1811
  %v1813 = vmul.f32 %v1776, 1.442695
  %v1814 = vpow.pop %v1813
  %v1815 = vmul.f32 %v1777, 1.442695
  %v1816 = vpow.pop %v1815
  %v1817 = vmul.f32 %v1778, 1.442695
  %v1818 = vpow.pop %v1817
  %v1819 = vsel %vm45, %v1780, 0.0
  %v1820 = vsel %vm155, %v1782, 0.0
  %v1821 = vadd.f32 %v1819, %v1820
  %v1822 = vrot.slane %v1821, 4
  %v1823 = vadd.f32 %v1821, %v1822
  %v1824 = vrot.slane %v1823, 2
  %v1825 = vadd.f32 %v1823, %v1824
  %v1826 = vrot.slane %v1825, 1
  %v1827 = vadd.f32 %v1825, %v1826
  %v1828 = vsel %vm45, %v1784, 0.0
  %v1829 = vsel %vm155, %v1786, 0.0
  %v1830 = vadd.f32 %v1828, %v1829
  %v1831 = vrot.slane %v1830, 4
  %v1832 = vadd.f32 %v1830, %v1831
  %v1833 = vrot.slane %v1832, 2
  %v1834 = vadd.f32 %v1832, %v1833
  %v1835 = vrot.slane %v1834, 1
  %v1836 = vadd.f32 %v1834, %v1835
  %v1837 = vsel %vm45, %v1788, 0.0
  %v1838 = vsel %vm155, %v1790, 0.0
  %v1839 = vadd.f32 %v1837, %v1838
  %v1840 = vrot.slane %v1839, 4
  %v1841 = vadd.f32 %v1839, %v1840
  %v1842 = vrot.slane %v1841, 2
  %v1843 = vadd.f32 %v1841, %v1842
  %v1844 = vrot.slane %v1843, 1
  %v1845 = vadd.f32 %v1843, %v1844
  %v1846 = vsel %vm45, %v1792, 0.0
  %v1847 = vsel %vm155, %v1794, 0.0
  %v1848 = vadd.f32 %v1846, %v1847
  %v1849 = vrot.slane %v1848, 4
  %v1850 = vadd.f32 %v1848, %v1849
  %v1851 = vrot.slane %v1850, 2
  %v1852 = vadd.f32 %v1850, %v1851
  %v1853 = vrot.slane %v1852, 1
  %v1854 = vadd.f32 %v1852, %v1853
  %v1855 = vsel %vm45, %v1796, 0.0
  %v1856 = vsel %vm155, %v1798, 0.0
  %v1857 = vadd.f32 %v1855, %v1856
  %v1858 = vrot.slane %v1857, 4
  %v1859 = vadd.f32 %v1857, %v1858
  %v1860 = vrot.slane %v1859, 2
  %v1861 = vadd.f32 %v1859, %v1860
  %v1862 = vrot.slane %v1861, 1
  %v1863 = vadd.f32 %v1861, %v1862
  %v1864 = vsel %vm45, %v1800, 0.0
  %v1865 = vsel %vm155, %v1802, 0.0
  %v1866 = vadd.f32 %v1864, %v1865
  %v1867 = vrot.slane %v1866, 4
  %v1868 = vadd.f32 %v1866, %v1867
  %v1869 = vrot.slane %v1868, 2
  %v1870 = vadd.f32 %v1868, %v1869
  %v1871 = vrot.slane %v1870, 1
  %v1872 = vadd.f32 %v1870, %v1871
  %v1873 = vsel %vm45, %v1804, 0.0
  %v1874 = vsel %vm155, %v1806, 0.0
  %v1875 = vadd.f32 %v1873, %v1874
  %v1876 = vrot.slane %v1875, 4
  %v1877 = vadd.f32 %v1875, %v1876
  %v1878 = vrot.slane %v1877, 2
  %v1879 = vadd.f32 %v1877, %v1878
  %v1880 = vrot.slane %v1879, 1
  %v1881 = vadd.f32 %v1879, %v1880
  %v1882 = vsel %vm45, %v1808, 0.0
  %v1883 = vsel %vm155, %v1810, 0.0
  %v1884 = vadd.f32 %v1882, %v1883
  %v1885 = vrot.slane %v1884, 4
  %v1886 = vadd.f32 %v1884, %v1885
  %v1887 = vrot.slane %v1886, 2
  %v1888 = vadd.f32 %v1886, %v1887
  %v1889 = vrot.slane %v1888, 1
  %v1890 = vadd.f32 %v1888, %v1889
  %v1891 = vsel %vm45, %v1812, 0.0
  %v1892 = vsel %vm155, %v1814, 0.0
  %v1893 = vadd.f32 %v1891, %v1892
  %v1894 = vrot.slane %v1893, 4
  %v1895 = vadd.f32 %v1893, %v1894
  %v1896 = vrot.slane %v1895, 2
  %v1897 = vadd.f32 %v1895, %v1896
  %v1898 = vrot.slane %v1897, 1
  %v1899 = vadd.f32 %v1897, %v1898
  %v1900 = vsel %vm45, %v1816, 0.0
  %v1901 = vsel %vm155, %v1818, 0.0
  %v1902 = vadd.f32 %v1900, %v1901
  %v1903 = vrot.slane %v1902, 4
  %v1904 = vadd.f32 %v1902, %v1903
  %v1905 = vrot.slane %v1904, 2
  %v1906 = vadd.f32 %v1904, %v1905
  %v1907 = vrot.slane %v1906, 1
  %v1908 = vadd.f32 %v1906, %v1907
  %v1909 = vrcp.pop %v1827
  %v1910 = vmul.f32 %v1827, %v1909
  %v1911 = vsub.f32 1.0, %v1910
  %v1912 = vmul.f32 %v1909, %v1911
  %v1913 = vadd.f32 %v1909, %v1912
  %vm1914 = vweird.f32 %v1827
  %vm1915 = vweird.f32 %v1909
  %vm1916 = vmor %vm1914, %vm1915
  %v1917 = vsel %vm1916, %v1909, %v1913
  %v1918 = vand.u32 2147483647, %v1827
  %vm1919 = vcmp.eq.f32.partialorder %v1918, 8.507059e+37
  %v1920 = vand.u32 %v1827, 2147483648
  %v1921 = vor.u32 1.1754944e-38, %v1920
  %v1922 = vsel %vm1919, %v1921, %v1917
  %v1923 = vmul.f32 %v1780, %v1922
  %v1924 = vmul.f32 %v1782, %v1922
  %v1925 = vrcp.pop %v1836
  %v1926 = vmul.f32 %v1836, %v1925
  %v1927 = vsub.f32 1.0, %v1926
  %v1928 = vmul.f32 %v1925, %v1927
  %v1929 = vadd.f32 %v1925, %v1928
  %vm1930 = vweird.f32 %v1836
  %vm1931 = vweird.f32 %v1925
  %vm1932 = vmor %vm1930, %vm1931
  %v1933 = vsel %vm1932, %v1925, %v1929
  %v1934 = vand.u32 2147483647, %v1836
  %vm1935 = vcmp.eq.f32.partialorder %v1934, 8.507059e+37
  %v1936 = vand.u32 %v1836, 2147483648
  %v1937 = vor.u32 1.1754944e-38, %v1936
  %v1938 = vsel %vm1935, %v1937, %v1933
  %v1939 = vmul.f32 %v1784, %v1938
  %v1940 = vmul.f32 %v1786, %v1938
  %v1941 = vrcp.pop %v1845
  %v1942 = vmul.f32 %v1845, %v1941
  %v1943 = vsub.f32 1.0, %v1942
  %v1944 = vmul.f32 %v1941, %v1943
  %v1945 = vadd.f32 %v1941, %v1944
  %vm1946 = vweird.f32 %v1845
  %vm1947 = vweird.f32 %v1941
  %vm1948 = vmor %vm1946, %vm1947
  %v1949 = vsel %vm1948, %v1941, %v1945
  %v1950 = vand.u32 2147483647, %v1845
  %vm1951 = vcmp.eq.f32.partialorder %v1950, 8.507059e+37
  %v1952 = vand.u32 %v1845, 2147483648
  %v1953 = vor.u32 1.1754944e-38, %v1952
  %v1954 = vsel %vm1951, %v1953, %v1949
  %v1955 = vmul.f32 %v1788, %v1954
  %v1956 = vmul.f32 %v1790, %v1954
  %v1957 = vrcp.pop %v1854
  %v1958 = vmul.f32 %v1854, %v1957
  %v1959 = vsub.f32 1.0, %v1958
  %v1960 = vmul.f32 %v1957, %v1959
  %v1961 = vadd.f32 %v1957, %v1960
  %vm1962 = vweird.f32 %v1854
  %vm1963 = vweird.f32 %v1957
  %vm1964 = vmor %vm1962, %vm1963
  %v1965 = vsel %vm1964, %v1957, %v1961
  %v1966 = vand.u32 2147483647, %v1854
  %vm1967 = vcmp.eq.f32.partialorder %v1966, 8.507059e+37
  %v1968 = vand.u32 %v1854, 2147483648
  %v1969 = vor.u32 1.1754944e-38, %v1968
  %v1970 = vsel %vm1967, %v1969, %v1965
  %v1971 = vmul.f32 %v1792, %v1970
  %v1972 = vmul.f32 %v1794, %v1970
  %v1973 = vrcp.pop %v1863
  %v1974 = vmul.f32 %v1863, %v1973
  %v1975 = vsub.f32 1.0, %v1974
  %v1976 = vmul.f32 %v1973, %v1975
  %v1977 = vadd.f32 %v1973, %v1976
  %vm1978 = vweird.f32 %v1863
  %vm1979 = vweird.f32 %v1973
  %vm1980 = vmor %vm1978, %vm1979
  %v1981 = vsel %vm1980, %v1973, %v1977
  %v1982 = vand.u32 2147483647, %v1863
  %vm1983 = vcmp.eq.f32.partialorder %v1982, 8.507059e+37
  %v1984 = vand.u32 %v1863, 2147483648
  %v1985 = vor.u32 1.1754944e-38, %v1984
  %v1986 = vsel %vm1983, %v1985, %v1981
  %v1987 = vmul.f32 %v1796, %v1986
  %v1988 = vmul.f32 %v1798, %v1986
  %v1989 = vrcp.pop %v1872
  %v1990 = vmul.f32 %v1872, %v1989
  %v1991 = vsub.f32 1.0, %v1990
  %v1992 = vmul.f32 %v1989, %v1991
  %v1993 = vadd.f32 %v1989, %v1992
  %vm1994 = vweird.f32 %v1872
  %vm1995 = vweird.f32 %v1989
  %vm1996 = vmor %vm1994, %vm1995
  %v1997 = vsel %vm1996, %v1989, %v1993
  %v1998 = vand.u32 2147483647, %v1872
  %vm1999 = vcmp.eq.f32.partialorder %v1998, 8.507059e+37
  %v2000 = vand.u32 %v1872, 2147483648
  %v2001 = vor.u32 1.1754944e-38, %v2000
  %v2002 = vsel %vm1999, %v2001, %v1997
  %v2003 = vmul.f32 %v1800, %v2002
  %v2004 = vmul.f32 %v1802, %v2002
  %v2005 = vrcp.pop %v1881
  %v2006 = vmul.f32 %v1881, %v2005
  %v2007 = vsub.f32 1.0, %v2006
  %v2008 = vmul.f32 %v2005, %v2007
  %v2009 = vadd.f32 %v2005, %v2008
  %vm2010 = vweird.f32 %v1881
  %vm2011 = vweird.f32 %v2005
  %vm2012 = vmor %vm2010, %vm2011
  %v2013 = vsel %vm2012, %v2005, %v2009
  %v2014 = vand.u32 2147483647, %v1881
  %vm2015 = vcmp.eq.f32.partialorder %v2014, 8.507059e+37
  %v2016 = vand.u32 %v1881, 2147483648
  %v2017 = vor.u32 1.1754944e-38, %v2016
  %v2018 = vsel %vm2015, %v2017, %v2013
  %v2019 = vmul.f32 %v1804, %v2018
  %v2020 = vmul.f32 %v1806, %v2018
  %v2021 = vrcp.pop %v1890
  %v2022 = vmul.f32 %v1890, %v2021
  %v2023 = vsub.f32 1.0, %v2022
  %v2024 = vmul.f32 %v2021, %v2023
  %v2025 = vadd.f32 %v2021, %v2024
  %vm2026 = vweird.f32 %v1890
  %vm2027 = vweird.f32 %v2021
  %vm2028 = vmor %vm2026, %vm2027
  %v2029 = vsel %vm2028, %v2021, %v2025
  %v2030 = vand.u32 2147483647, %v1890
  %vm2031 = vcmp.eq.f32.partialorder %v2030, 8.507059e+37
  %v2032 = vand.u32 %v1890, 2147483648
  %v2033 = vor.u32 1.1754944e-38, %v2032
  %v2034 = vsel %vm2031, %v2033, %v2029
  %v2035 = vmul.f32 %v1808, %v2034
  %v2036 = vmul.f32 %v1810, %v2034
  %v2037 = vrcp.pop %v1899
  %v2038 = vmul.f32 %v1899, %v2037
  %v2039 = vsub.f32 1.0, %v2038
  %v2040 = vmul.f32 %v2037, %v2039
  %v2041 = vadd.f32 %v2037, %v2040
  %vm2042 = vweird.f32 %v1899
  %vm2043 = vweird.f32 %v2037
  %vm2044 = vmor %vm2042, %vm2043
  %v2045 = vsel %vm2044, %v2037, %v2041
  %v2046 = vand.u32 2147483647, %v1899
  %vm2047 = vcmp.eq.f32.partialorder %v2046, 8.507059e+37
  %v2048 = vand.u32 %v1899, 2147483648
  %v2049 = vor.u32 1.1754944e-38, %v2048
  %v2050 = vsel %vm2047, %v2049, %v2045
  %v2051 = vmul.f32 %v1812, %v2050
  %v2052 = vmul.f32 %v1814, %v2050
  %v2053 = vrcp.pop %v1908
  %v2054 = vmul.f32 %v1908, %v2053
  %v2055 = vsub.f32 1.0, %v2054
  %v2056 = vmul.f32 %v2053, %v2055
  %v2057 = vadd.f32 %v2053, %v2056
  %vm2058 = vweird.f32 %v1908
  %vm2059 = vweird.f32 %v2053
  %vm2060 = vmor %vm2058, %vm2059
  %v2061 = vsel %vm2060, %v2053, %v2057
  %v2062 = vand.u32 2147483647, %v1908
  %vm2063 = vcmp.eq.f32.partialorder %v2062, 8.507059e+37
  %v2064 = vand.u32 %v1908, 2147483648
  %v2065 = vor.u32 1.1754944e-38, %v2064
  %v2066 = vsel %vm2063, %v2065, %v2061
  %v2067 = vmul.f32 %v1816, %v2066
  %v2068 = vmul.f32 %v1818, %v2066
  %v2069 = vmul.f32 %v1923, %v1606
  %v2070 = vmul.f32 %v1924, %v1609
  %v2071 = vmul.f32 %v1939, %v1606
  %v2072 = vmul.f32 %v1940, %v1609
  %v2073 = vmul.f32 %v1955, %v1606
  %v2074 = vmul.f32 %v1956, %v1609
  %v2075 = vmul.f32 %v1971, %v1606
  %v2076 = vmul.f32 %v1972, %v1609
  %v2077 = vmul.f32 %v1987, %v1606
  %v2078 = vmul.f32 %v1988, %v1609
  %v2079 = vmul.f32 %v2003, %v1606
  %v2080 = vmul.f32 %v2004, %v1609
  %v2081 = vmul.f32 %v2019, %v1606
  %v2082 = vmul.f32 %v2020, %v1609
  %v2083 = vmul.f32 %v2035, %v1606
  %v2084 = vmul.f32 %v2036, %v1609
  %v2085 = vmul.f32 %v2051, %v1606
  %v2086 = vmul.f32 %v2052, %v1609
  %v2087 = vmul.f32 %v2067, %v1606
  %v2088 = vmul.f32 %v2068, %v1609
  %v2089 = vsel %vm45, %v2069, 0.0
  %v2090 = vsel %vm155, %v2070, 0.0
  %v2091 = vadd.f32 %v2089, %v2090
  %v2092 = vrot.slane %v2091, 4
  %v2093 = vadd.f32 %v2091, %v2092
  %v2094 = vrot.slane %v2093, 2
  %v2095 = vadd.f32 %v2093, %v2094
  %v2096 = vrot.slane %v2095, 1
  %v2097 = vadd.f32 %v2095, %v2096
  %v2098 = vsel %vm45, %v2071, 0.0
  %v2099 = vsel %vm155, %v2072, 0.0
  %v2100 = vadd.f32 %v2098, %v2099
  %v2101 = vrot.slane %v2100, 4
  %v2102 = vadd.f32 %v2100, %v2101
  %v2103 = vrot.slane %v2102, 2
  %v2104 = vadd.f32 %v2102, %v2103
  %v2105 = vrot.slane %v2104, 1
  %v2106 = vadd.f32 %v2104, %v2105
  %v2107 = vsel %vm45, %v2073, 0.0
  %v2108 = vsel %vm155, %v2074, 0.0
  %v2109 = vadd.f32 %v2107, %v2108
  %v2110 = vrot.slane %v2109, 4
  %v2111 = vadd.f32 %v2109, %v2110
  %v2112 = vrot.slane %v2111, 2
  %v2113 = vadd.f32 %v2111, %v2112
  %v2114 = vrot.slane %v2113, 1
  %v2115 = vadd.f32 %v2113, %v2114
  %v2116 = vsel %vm45, %v2075, 0.0
  %v2117 = vsel %vm155, %v2076, 0.0
  %v2118 = vadd.f32 %v2116, %v2117
  %v2119 = vrot.slane %v2118, 4
  %v2120 = vadd.f32 %v2118, %v2119
  %v2121 = vrot.slane %v2120, 2
  %v2122 = vadd.f32 %v2120, %v2121
  %v2123 = vrot.slane %v2122, 1
  %v2124 = vadd.f32 %v2122, %v2123
  %v2125 = vsel %vm45, %v2077, 0.0
  %v2126 = vsel %vm155, %v2078, 0.0
  %v2127 = vadd.f32 %v2125, %v2126
  %v2128 = vrot.slane %v2127, 4
  %v2129 = vadd.f32 %v2127, %v2128
  %v2130 = vrot.slane %v2129, 2
  %v2131 = vadd.f32 %v2129, %v2130
  %v2132 = vrot.slane %v2131, 1
  %v2133 = vadd.f32 %v2131, %v2132
  %v2134 = vsel %vm45, %v2079, 0.0
  %v2135 = vsel %vm155, %v2080, 0.0
  %v2136 = vadd.f32 %v2134, %v2135
  %v2137 = vrot.slane %v2136, 4
  %v2138 = vadd.f32 %v2136, %v2137
  %v2139 = vrot.slane %v2138, 2
  %v2140 = vadd.f32 %v2138, %v2139
  %v2141 = vrot.slane %v2140, 1
  %v2142 = vadd.f32 %v2140, %v2141
  %v2143 = vsel %vm45, %v2081, 0.0
  %v2144 = vsel %vm155, %v2082, 0.0
  %v2145 = vadd.f32 %v2143, %v2144
  %v2146 = vrot.slane %v2145, 4
  %v2147 = vadd.f32 %v2145, %v2146
  %v2148 = vrot.slane %v2147, 2
  %v2149 = vadd.f32 %v2147, %v2148
  %v2150 = vrot.slane %v2149, 1
  %v2151 = vadd.f32 %v2149, %v2150
  %v2152 = vsel %vm45, %v2083, 0.0
  %v2153 = vsel %vm155, %v2084, 0.0
  %v2154 = vadd.f32 %v2152, %v2153
  %v2155 = vrot.slane %v2154, 4
  %v2156 = vadd.f32 %v2154, %v2155
  %v2157 = vrot.slane %v2156, 2
  %v2158 = vadd.f32 %v2156, %v2157
  %v2159 = vrot.slane %v2158, 1
  %v2160 = vadd.f32 %v2158, %v2159
  %v2161 = vsel %vm45, %v2085, 0.0
  %v2162 = vsel %vm155, %v2086, 0.0
  %v2163 = vadd.f32 %v2161, %v2162
  %v2164 = vrot.slane %v2163, 4
  %v2165 = vadd.f32 %v2163, %v2164
  %v2166 = vrot.slane %v2165, 2
  %v2167 = vadd.f32 %v2165, %v2166
  %v2168 = vrot.slane %v2167, 1
  %v2169 = vadd.f32 %v2167, %v2168
  %v2170 = vsel %vm45, %v2087, 0.0
  %v2171 = vsel %vm155, %v2088, 0.0
  %v2172 = vadd.f32 %v2170, %v2171
  %v2173 = vrot.slane %v2172, 4
  %v2174 = vadd.f32 %v2172, %v2173
  %v2175 = vrot.slane %v2174, 2
  %v2176 = vadd.f32 %v2174, %v2175
  %v2177 = vrot.slane %v2176, 1
  %v2178 = vadd.f32 %v2176, %v2177
  %v2179 = vld [vmem:[%s2 + $0x2f0] sm:$0xff]
  %v2180 = vld [vmem:[%s2 + $0x300] sm:$0xff]
  %v2181 = vld [vmem:[%s2 + $0x310] sm:$0xff]
  %v2182 = vld [vmem:[%s2 + $0x320] sm:$0xff]
  %v2183 = vld [vmem:[%s2 + $0x330] sm:$0xff]
  %v2184 = vld [vmem:[%s2 + $0x340] sm:$0xff]
  %v2185 = vld [vmem:[%s2 + $0x350] sm:$0xff]
  %v2186 = vld [vmem:[%s2 + $0x360] sm:$0xff]
  %v2187 = vld [vmem:[%s2 + $0x370] ss:$0 sm:$0xff]
  %v2198 = vsel %vm684, %v2106, %v2097
  %v2199 = vsel %vm686, %v2115, %v2198
  %v2200 = vsel %vm688, %v2124, %v2199
  %v2201 = vsel %vm690, %v2133, %v2200
  %v2202 = vsel %vm692, %v2142, %v2201
  %v2203 = vsel %vm694, %v2151, %v2202
  %v2204 = vsel %vm696, %v2160, %v2203
  %v2205 = vsel %vm684, %v2178, %v2169
  %v2206 = vsel %vm45, %v2204, 0
  %v2208 = vsel %vm45, %v2205, 0
  %2210 = vmatpush.msra.mxu0 0.0
  %2211 = vmatpush.msra.mxu0 0.0
  %2212 = vmatpush.msra.mxu0 0.0
  %2213 = vmatpush.msra.mxu0 0.0
  %2214 = vmatpush.msra.mxu0 0.0
  %2215 = vmatpush.msra.mxu0 0.0
  %2216 = vmatpush.msra.mxu0 0.0
  %2217 = vmatpush.msra.mxu0 0.0
  %2218 = vmatpush.msra.mxu0 %v2186
  %2219 = vmatpush.msra.mxu0 %v2185
  %2220 = vmatpush.msra.mxu0 %v2184
  %2221 = vmatpush.msra.mxu0 %v2183
  %2222 = vmatpush.msra.mxu0 %v2182
  %2223 = vmatpush.msra.mxu0 %v2181
  %2224 = vmatpush.msra.mxu0 %v2180
  %2225 = vmatpush.msra.mxu0 %v2179
  %2226 = vmatmul.f32.gmra.mxu0 %v2206
  %v2227 = vpop.f32.mrf.mxu0
  %v2228 = vadd.f32 %v2187, %v2227
  %2229 = vmatmul.f32.gmra.mxu0 %v2208
  %v2230 = vpop.f32.mrf.mxu0
  %v2231 = vadd.f32 %v2187, %v2230
  %2232 = vdwg.mxu0
  %v2233 = vadd.f32 %v1505, %v2228
  %v2234 = vadd.f32 %v1506, %v2231
  %v2235 = vld [vmem:[%s2 + $0x520] sm:$0xff]
  %v2236 = vld [vmem:[%s2 + $0x530] sm:$0xff]
  %v2237 = vld [vmem:[%s2 + $0x540] sm:$0xff]
  %v2238 = vld [vmem:[%s2 + $0x550] sm:$0xff]
  %v2239 = vld [vmem:[%s2 + $0x560] sm:$0xff]
  %v2240 = vld [vmem:[%s2 + $0x570] sm:$0xff]
  %v2241 = vld [vmem:[%s2 + $0x580] sm:$0xff]
  %v2242 = vld [vmem:[%s2 + $0x590] sm:$0xff]
  %v2243 = vld [vmem:[%s2 + $0x5a0] ss:$0 sm:$0xff]
  %v2245 = vsel %vm45, %v2233, 0
  %v2248 = vsel %vm45, %v2234, 0
  %2250 = vmatpush.msra.mxu0 0.0
  %2251 = vmatpush.msra.mxu0 0.0
  %2252 = vmatpush.msra.mxu0 0.0
  %2253 = vmatpush.msra.mxu0 0.0
  %2254 = vmatpush.msra.mxu0 0.0
  %2255 = vmatpush.msra.mxu0 0.0
  %2256 = vmatpush.msra.mxu0 0.0
  %2257 = vmatpush.msra.mxu0 0.0
  %2258 = vmatpush.msra.mxu0 %v2242
  %2259 = vmatpush.msra.mxu0 %v2241
  %2260 = vmatpush.msra.mxu0 %v2240
  %2261 = vmatpush.msra.mxu0 %v2239
  %2262 = vmatpush.msra.mxu0 %v2238
  %2263 = vmatpush.msra.mxu0 %v2237
  %2264 = vmatpush.msra.mxu0 %v2236
  %2265 = vmatpush.msra.mxu0 %v2235
  %2266 = vmatmul.f32.gmra.mxu0 %v2245
  %v2267 = vpop.f32.mrf.mxu0
  %v2268 = vadd.f32 %v2243, %v2267
  %2269 = vmatmul.f32.gmra.mxu0 %v2248
  %v2270 = vpop.f32.mrf.mxu0
  %v2271 = vadd.f32 %v2243, %v2270
  %2272 = vdwg.mxu0
  %v2273 = vld [vmem:[%s2 + $0x5b0] sm:$0xff]
  %v2274 = vld [vmem:[%s2 + $0x5c0] sm:$0xff]
  %v2275 = vld [vmem:[%s2 + $0x5d0] sm:$0xff]
  %v2276 = vld [vmem:[%s2 + $0x5e0] sm:$0xff]
  %v2277 = vld [vmem:[%s2 + $0x5f0] sm:$0xff]
  %v2278 = vld [vmem:[%s2 + $0x600] sm:$0xff]
  %v2279 = vld [vmem:[%s2 + $0x610] sm:$0xff]
  %v2280 = vld [vmem:[%s2 + $0x620] sm:$0xff]
  %v2281 = vld [vmem:[%s2 + $0x630] sm:$0xff]
  %v2282 = vld [vmem:[%s2 + $0x640] sm:$0xff]
  %v2283 = vld [vmem:[%s2 + $0x650] sm:$0xff]
  %v2284 = vld [vmem:[%s2 + $0x660] sm:$0xff]
  %v2285 = vld [vmem:[%s2 + $0x670] sm:$0xff]
  %v2286 = vld [vmem:[%s2 + $0x680] sm:$0xff]
  %v2287 = vld [vmem:[%s2 + $0x690] sm:$0xff]
  %v2288 = vld [vmem:[%s2 + $0x6a0] sm:$0xff]
  %v2289 = vld [vmem:[%s2 + $0x6b0] ss:$0 sm:$0xff]
  %2290 = vmatpush.msra.mxu0 %v2288
  %2291 = vmatpush.msra.mxu0 %v2287
  %2292 = vmatpush.msra.mxu0 %v2286
  %2293 = vmatpush.msra.mxu0 %v2285
  %2294 = vmatpush.msra.mxu0 %v2284
  %2295 = vmatpush.msra.mxu0 %v2283
  %2296 = vmatpush.msra.mxu0 %v2282
  %2297 = vmatpush.msra.mxu0 %v2281
  %2298 = vmatpush.msra.mxu0 %v2280
  %2299 = vmatpush.msra.mxu0 %v2279
  %2300 = vmatpush.msra.mxu0 %v2278
  %2301 = vmatpush.msra.mxu0 %v2277
  %2302 = vmatpush.msra.mxu0 %v2276
  %2303 = vmatpush.msra.mxu0 %v2275
  %2304 = vmatpush.msra.mxu0 %v2274
  %2305 = vmatpush.msra.mxu0 %v2273
  %2306 = vmatmul.f32.gmra.mxu0 %v2268
  %v2307 = vpop.f32.mrf.mxu0
  %v2308 = vadd.f32 %v2289, %v2307
  %2309 = vmatmul.f32.gmra.mxu0 %v2271
  %v2310 = vpop.f32.mrf.mxu0
  %v2311 = vadd.f32 %v2289, %v2310
  %2312 = vdwg.mxu0
  %v2313 = vadd.f32 %v2233, %v2308
  %v2314 = vadd.f32 %v2234, %v2311
  %v2315 = vsub.f32 0.0, %v2313
  %v2316 = vsub.f32 0.0, %v2314
  %v2317 = vmul.f32 %v2315, 1.442695
  %v2318 = vpow.pop %v2317
  %v2319 = vmul.f32 %v2316, 1.442695
  %v2320 = vpow.pop %v2319
  %v2321 = vadd.f32 %v2318, 1.0
  %v2322 = vadd.f32 %v2320, 1.0
  %v2323 = vrcp.pop %v2321
  %v2324 = vmul.f32 %v2321, %v2323
  %v2325 = vsub.f32 1.0, %v2324
  %v2326 = vmul.f32 %v2323, %v2325
  %v2327 = vadd.f32 %v2323, %v2326
  %vm2328 = vweird.f32 %v2321
  %vm2329 = vweird.f32 %v2323
  %vm2330 = vmor %vm2328, %vm2329
  %v2331 = vsel %vm2330, %v2323, %v2327
  %v2332 = vand.u32 2147483647, %v2321
  %vm2333 = vcmp.eq.f32.partialorder %v2332, 8.507059e+37
  %v2334 = vand.u32 %v2321, 2147483648
  %v2335 = vor.u32 1.1754944e-38, %v2334
  %v2336 = vsel %vm2333, %v2335, %v2331
  %v2337 = vmul.f32 1.0, %v2336
  %v2338 = vrcp.pop %v2322
  %v2339 = vmul.f32 %v2322, %v2338
  %v2340 = vsub.f32 1.0, %v2339
  %v2341 = vmul.f32 %v2338, %v2340
  %v2342 = vadd.f32 %v2338, %v2341
  %vm2343 = vweird.f32 %v2322
  %vm2344 = vweird.f32 %v2338
  %vm2345 = vmor %vm2343, %vm2344
  %v2346 = vsel %vm2345, %v2338, %v2342
  %v2347 = vand.u32 2147483647, %v2322
  %vm2348 = vcmp.eq.f32.partialorder %v2347, 8.507059e+37
  %v2349 = vand.u32 %v2322, 2147483648
  %v2350 = vor.u32 1.1754944e-38, %v2349
  %v2351 = vsel %vm2348, %v2350, %v2346
  %v2352 = vmul.f32 1.0, %v2351
  %2353 = vst.msk [vmem:[%s3] sm:$0xff] %vm45, %v2337
  %2354 = vst.msk [vmem:[%s3 + $0x8] sm:$0x3] %vm155, %v2352
  // Predicated region
  $region14: #{tranad_basic_forward.1} parent=0 // pred_check
    _
  $region15: #{tranad_basic_forward.1} parent=0 // pred_check_branch
    %2356 = sbr.rel (0) target = $region17
  $region16: #{tranad_basic_forward.1} parent=0 // pred_region
    _
  $region17: #{tranad_basic_forward.1} parent=0 // pred_fallthru
    _
  // Predicated region
  $region18: #{tranad_basic_forward.1} parent=0 // pred_check
    _
  $region19: #{tranad_basic_forward.1} parent=0 // pred_check_branch
    %2358 = sbr.rel (0) target = $region21
  $region20: #{tranad_basic_forward.1} parent=0 // pred_region
    _
  $region21: #{tranad_basic_forward.1} parent=0 // pred_fallthru
    _

</llo_original>
